<compile_context>
chip_gen: v6e
topology: v6e:2x2x1
jax: 0.10.0
libtpu: 0.0.40
codegen_flags: <defaults>
</compile_context>

<pallas_src>
import functools

import jax
import jax.numpy as jnp
from jax.experimental import pallas as pl
from jax.experimental.pallas import tpu as pltpu


def _round_up(x, m):
    return ((x + m - 1) // m) * m


def _propagator_kernel(a_ref, s_comb_ref, s_cur_ref, w_all_ref, w_h3_ref,
                       out_ref, out_scr, *, n_node, state_dim):
    D = state_dim
    Bt = a_ref.shape[0]
    M = Bt * n_node
    f32 = jnp.float32
    mm_dtype = w_all_ref.dtype

    # ---- fused message passing: A (Bt,n,2NE) @ s_comb (Bt,2NE,2D) ----------
    # s_comb is block-diagonal, so the result is [a_in | a_out] per node.
    a_all = jnp.einsum('bnm,bmd->bnd', a_ref[...], s_comb_ref[...],
                       preferred_element_type=f32)            # (Bt, n, 2D) f32

    # ---- flatten batch into the matmul M dimension (free when n_node%8==0) -
    a_flat = a_all.reshape(M, 2 * D)                           # f32
    sc_mm = s_cur_ref[...]                                     # (M, D) mm_dtype
    sc = sc_mm.astype(f32)                                     # f32 for elementwise

    # cast BEFORE concatenation (no f32 (M, 3D) temporaries)
    gate_in = jnp.concatenate([a_flat.astype(mm_dtype), sc_mm], axis=-1)  # (M, 3D)

    # ---- one wide matmul: (M, 3D) @ (3D, 3D) -> [r_pre | z_pre | h_pre0] ---
    pre = jnp.dot(gate_in, w_all_ref[...], preferred_element_type=f32)
    r = jax.nn.sigmoid(pre[:, :D])
    z = jax.nn.sigmoid(pre[:, D:2 * D])

    # ---- candidate correction:  [ai|ao|r*sc]@Wh = h_pre0 + ((r-1)*sc)@Wh3 --
    corr = jnp.dot(((r - 1.0) * sc).astype(mm_dtype), w_h3_ref[...],
                   preferred_element_type=f32)
    h_hat = jnp.tanh(pre[:, 2 * D:] + corr)

    # ---- GRU update (all f32 elementwise; v5e-friendly) ---------------------
    out = (1.0 - z) * sc + z * h_hat                           # (M, D) f32

    # ---- lane-dense store: relayout (M, D) -> (Bt, n_node*D) via scratch ----
    out_scr[...] = out.reshape(Bt, n_node, D).astype(out_scr.dtype)
    out_ref[...] = jnp.concatenate(
        [out_scr[:, j, :] for j in range(n_node)], axis=-1)


def propagator_forward(state_in, state_out, state_cur, A, Wr_t, Wz_t, Wh_t,
                       *, n_node, n_edge_types, state_dim,
                       batch_block=256, matmul_dtype=jnp.bfloat16):
    B = state_cur.shape[0]
    NE = n_node * n_edge_types
    D = state_dim
    out_dtype = state_cur.dtype
    mm = matmul_dtype   # NOTE (v5e): keep matmul operands bf16, elementwise f32.

    # ---- wrapper-side (XLA) layout prep -------------------------------------
    # Block-diagonal state so ONE bmm yields [a_in | a_out] with K = 2*NE.
    zin = jnp.zeros_like(state_in)
    zout = jnp.zeros_like(state_out)
    s_comb = jnp.concatenate(
        [jnp.concatenate([state_in, zin], axis=2),
         jnp.concatenate([zout, state_out], axis=2)], axis=1).astype(mm)
    A_mm = A.astype(mm)
    s_cur_mm = state_cur.astype(mm)

    # Fused gate weights: one (3D, 3D) matmul + a (D, D) candidate correction.
    W_all = jnp.concatenate([Wr_t, Wz_t, Wh_t], axis=1).astype(mm)   # (3D, 3D)
    W_h3 = Wh_t[2 * D:, :].astype(mm)                                # (D, D)

    # ---- batch blocking ------------------------------------------------------
    Bt = max(1, min(batch_block, B))
    if pl.cdiv(B, Bt) < 2 and B > 8:
        Bt = pl.cdiv(B, 2)          # v7x: >= 2 grid steps so both TCs get work
    Bt = _round_up(Bt, 8)           # sublane-align the lane-dense output block
    n_blocks = pl.cdiv(B, Bt)
    Bpad = n_blocks * Bt
    if Bpad != B:
        pad3 = [(0, Bpad - B), (0, 0), (0, 0)]
        A_mm = jnp.pad(A_mm, pad3)
        s_comb = jnp.pad(s_comb, pad3)
        s_cur_mm = jnp.pad(s_cur_mm, pad3)

    # state_cur pre-flattened to (Bpad*n_node, D): kernel uses it as (M, D)
    # directly, no in-kernel reshape of a packed bf16 tile.
    s_cur_flat = s_cur_mm.reshape(Bpad * n_node, D)

    kernel = functools.partial(_propagator_kernel, n_node=n_node, state_dim=D)

    out2d = pl.pallas_call(
        kernel,
        out_shape=jax.ShapeDtypeStruct((Bpad, n_node * D), out_dtype),
        grid_spec=pltpu.PrefetchScalarGridSpec(
            num_scalar_prefetch=0,
            grid=(n_blocks,),
            in_specs=[
                pl.BlockSpec((Bt, n_node, 2 * NE), lambda b: (b, 0, 0)),  # A
                pl.BlockSpec((Bt, 2 * NE, 2 * D), lambda b: (b, 0, 0)),   # s_comb
                pl.BlockSpec((Bt * n_node, D), lambda b: (b, 0)),         # state_cur
                pl.BlockSpec((3 * D, 3 * D), lambda b: (0, 0)),           # W_all (resident)
                pl.BlockSpec((D, D), lambda b: (0, 0)),                   # W_h3  (resident)
            ],
            out_specs=pl.BlockSpec((Bt, n_node * D), lambda b: (b, 0)),
            scratch_shapes=[pltpu.VMEM((Bt, n_node, D), out_dtype)],
        ),
        compiler_params=pltpu.CompilerParams(
            dimension_semantics=("parallel",),
            vmem_limit_bytes=48 * 1024 * 1024),   # safe on v7x (64 MiB physical)
    )(A_mm, s_comb, s_cur_flat, W_all, W_h3)

    return out2d.reshape(Bpad, n_node, D)[:B]


def propagator_ref(state_in, state_out, state_cur, A, Wr_t, Wz_t, Wh_t,
                   *, n_node, n_edge_types, state_dim):
    NE = n_node * n_edge_types
    A_in = A[:, :, :NE]
    A_out = A[:, :, NE:]
    a_in = jnp.einsum('bnm,bmd->bnd', A_in, state_in)
    a_out = jnp.einsum('bnm,bmd->bnd', A_out, state_out)
    a = jnp.concatenate((a_in, a_out, state_cur), axis=2)
    r = jax.nn.sigmoid(a @ Wr_t)
    z = jax.nn.sigmoid(a @ Wz_t)
    joined = jnp.concatenate((a_in, a_out, r * state_cur), axis=2)
    h_hat = jnp.tanh(joined @ Wh_t)
    return (1.0 - z) * state_cur + z * h_hat


if __name__ == "__main__":
    state_dim = 32
    n_node = 8
    n_edge_types = 2
    B = 12                      # exercises batch alignment/padding + 2-step grid
    NE = n_node * n_edge_types

    key = jax.random.PRNGKey(0)
    k1, k2, k3, k4, k5, k6, k7 = jax.random.split(key, 7)

    state_in = jax.random.normal(k1, (B, NE, state_dim), dtype=jnp.float32)
    state_out = jax.random.normal(k2, (B, NE, state_dim), dtype=jnp.float32)
    state_cur = jax.random.normal(k3, (B, n_node, state_dim), dtype=jnp.float32)
    A = jax.random.normal(k4, (B, n_node, 2 * NE), dtype=jnp.float32)

    # PyTorch-like uniform init, bias_flag=False.
    fan_in = 3 * state_dim
    bound = 1.0 / jnp.sqrt(fan_in)
    Wr_t = jax.random.uniform(k5, (3 * state_dim, state_dim), jnp.float32, -bound, bound)
    Wz_t = jax.random.uniform(k6, (3 * state_dim, state_dim), jnp.float32, -bound, bound)
    Wh_t = jax.random.uniform(k7, (3 * state_dim, state_dim), jnp.float32, -bound, bound)

    common = dict(n_node=n_node, n_edge_types=n_edge_types, state_dim=state_dim)

    ref = propagator_ref(state_in, state_out, state_cur, A,
                         Wr_t, Wz_t, Wh_t, **common)

    # f32 matmul path: tight check vs the XLA reference.
    out_f32 = propagator_forward(state_in, state_out, state_cur, A,
                                 Wr_t, Wz_t, Wh_t,
                                 matmul_dtype=jnp.float32, **common)
    out_f32 = jax.block_until_ready(out_f32)
    assert out_f32.shape == ref.shape
    assert jnp.allclose(out_f32, ref, atol=1e-4, rtol=1e-4), "f32 kernel mismatch"

    # bf16 matmul path (production config): bf16 operands, f32 accum/elementwise.
    out_bf16 = propagator_forward(state_in, state_out, state_cur, A,
                                  Wr_t, Wz_t, Wh_t,
                                  matmul_dtype=jnp.bfloat16, **common)
    out_bf16 = jax.block_until_ready(out_bf16)
    assert jnp.allclose(out_bf16, ref, atol=1e-1, rtol=5e-2), "bf16 kernel mismatch"

    print("KERNEL_OK")
</pallas_src>

<mosaic_0001>
module attributes {stable_mosaic.version = 11 : i64} {
  func.func @_propagator_kernel(%arg0: i32, %arg1: memref<8x8x32xf32, #tpu.memory_space<vmem>>, %arg2: memref<8x32x64xf32, #tpu.memory_space<vmem>>, %arg3: memref<64x32xf32, #tpu.memory_space<vmem>>, %arg4: memref<96x96xf32, #tpu.memory_space<vmem>>, %arg5: memref<32x32xf32, #tpu.memory_space<vmem>>, %arg6: memref<8x256xf32, #tpu.memory_space<vmem>>, %arg7: memref<8x8x32xf32, #tpu.memory_space<vmem>>) attributes {dimension_semantics = [#tpu.dimension_semantics<parallel>], iteration_bounds = array<i64: 2>, scalar_prefetch = 0 : i64, scratch_operands = 1 : i64, tpu.core_type = #tpu.core_type<tc>, window_params = [{transform_indices = @transform_0, window_bounds = array<i64: 8, 8, 32>}, {transform_indices = @transform_1, window_bounds = array<i64: 8, 32, 64>}, {transform_indices = @transform_2, window_bounds = array<i64: 64, 32>}, {pipeline_mode = #tpu.pipeline_mode<synchronous>, transform_indices = @transform_3, window_bounds = array<i64: 96, 96>}, {pipeline_mode = #tpu.pipeline_mode<synchronous>, transform_indices = @transform_4, window_bounds = array<i64: 32, 32>}, {transform_indices = @transform_5, window_bounds = array<i64: 8, 256>}]} {
    %c0 = arith.constant 0 : index
    %c0_0 = arith.constant 0 : index
    %c0_1 = arith.constant 0 : index
    %0 = vector.load %arg1[%c0, %c0_0, %c0_1] : memref<8x8x32xf32, #tpu.memory_space<vmem>>, vector<8x8x32xf32>
    %c0_2 = arith.constant 0 : index
    %c0_3 = arith.constant 0 : index
    %c0_4 = arith.constant 0 : index
    %1 = vector.load %arg2[%c0_2, %c0_3, %c0_4] : memref<8x32x64xf32, #tpu.memory_space<vmem>>, vector<8x32x64xf32>
    "tpu.trace_start"() <{level = 10 : i32, message = "bnm,bmd->bnd"}> : () -> ()
    %cst = arith.constant dense<0.000000e+00> : vector<8x8x64xf32>
    %2 = tpu.matmul %0, %1, %cst {dimension_numbers = #tpu.dot_dimension_numbers<[2], [1], [1], [2], [0, 0, 0, 1, 1, 2], [0], [0]>} : vector<8x8x32xf32>, vector<8x32x64xf32>, vector<8x8x64xf32> -> vector<8x8x64xf32>
    "tpu.trace_stop"() : () -> ()
    %3 = vector.shape_cast %2 : vector<8x8x64xf32> to vector<64x64xf32>
    %c0_5 = arith.constant 0 : index
    %c0_6 = arith.constant 0 : index
    %4 = vector.load %arg3[%c0_5, %c0_6] : memref<64x32xf32, #tpu.memory_space<vmem>>, vector<64x32xf32>
    %5 = tpu.concatenate %3, %4 in 1 : vector<64x64xf32>, vector<64x32xf32> -> vector<64x96xf32>
    %c0_7 = arith.constant 0 : index
    %c0_8 = arith.constant 0 : index
    %6 = vector.load %arg4[%c0_7, %c0_8] : memref<96x96xf32, #tpu.memory_space<vmem>>, vector<96x96xf32>
    %cst_9 = arith.constant dense<0.000000e+00> : vector<64x96xf32>
    %7 = tpu.matmul %5, %6, %cst_9 {dimension_numbers = #tpu.dot_dimension_numbers<[1], [0], [0], [1], [0, 0, 1, 1], [], []>} : vector<64x96xf32>, vector<96x96xf32>, vector<64x96xf32> -> vector<64x96xf32>
    %8 = vector.extract_strided_slice %7 {offsets = [0, 0], sizes = [64, 32], strides = [1, 1]} : vector<64x96xf32> to vector<64x32xf32>
    %9 = arith.negf %8 : vector<64x32xf32>
    %10 = math.exp %9 : vector<64x32xf32>
    %cst_10 = arith.constant 1.000000e+00 : f32
    %11 = vector.broadcast %cst_10 : f32 to vector<64x32xf32>
    %12 = arith.addf %11, %10 : vector<64x32xf32>
    %13 = arith.divf %11, %12 : vector<64x32xf32>
    %14 = vector.extract_strided_slice %7 {offsets = [0, 32], sizes = [64, 32], strides = [1, 1]} : vector<64x96xf32> to vector<64x32xf32>
    %15 = arith.negf %14 : vector<64x32xf32>
    %16 = math.exp %15 : vector<64x32xf32>
    %cst_11 = arith.constant 1.000000e+00 : f32
    %17 = vector.broadcast %cst_11 : f32 to vector<64x32xf32>
    %18 = arith.addf %17, %16 : vector<64x32xf32>
    %19 = arith.divf %17, %18 : vector<64x32xf32>
    %cst_12 = arith.constant 1.000000e+00 : f32
    %20 = vector.broadcast %cst_12 : f32 to vector<64x32xf32>
    %21 = arith.subf %13, %20 : vector<64x32xf32>
    %22 = arith.mulf %21, %4 : vector<64x32xf32>
    %c0_13 = arith.constant 0 : index
    %c0_14 = arith.constant 0 : index
    %23 = vector.load %arg5[%c0_13, %c0_14] : memref<32x32xf32, #tpu.memory_space<vmem>>, vector<32x32xf32>
    %cst_15 = arith.constant dense<0.000000e+00> : vector<64x32xf32>
    %24 = tpu.matmul %22, %23, %cst_15 {dimension_numbers = #tpu.dot_dimension_numbers<[1], [0], [0], [1], [0, 0, 1, 1], [], []>} : vector<64x32xf32>, vector<32x32xf32>, vector<64x32xf32> -> vector<64x32xf32>
    %25 = vector.extract_strided_slice %7 {offsets = [0, 64], sizes = [64, 32], strides = [1, 1]} : vector<64x96xf32> to vector<64x32xf32>
    %26 = arith.addf %25, %24 : vector<64x32xf32>
    %27 = math.tanh %26 : vector<64x32xf32>
    %cst_16 = arith.constant 1.000000e+00 : f32
    %28 = vector.broadcast %cst_16 : f32 to vector<64x32xf32>
    %29 = arith.subf %28, %19 : vector<64x32xf32>
    %30 = arith.mulf %29, %4 : vector<64x32xf32>
    %31 = arith.mulf %19, %27 : vector<64x32xf32>
    %32 = arith.addf %30, %31 : vector<64x32xf32>
    %33 = vector.shape_cast %32 : vector<64x32xf32> to vector<8x8x32xf32>
    %c0_17 = arith.constant 0 : index
    %c0_18 = arith.constant 0 : index
    %c0_19 = arith.constant 0 : index
    %34 = vector.load %arg7[%c0_17, %c0_18, %c0_19] : memref<8x8x32xf32, #tpu.memory_space<vmem>>, vector<8x8x32xf32>
    tpu.vector_store %arg7[%c0_17, %c0_18, %c0_19], %33 {strides = array<i32>} : memref<8x8x32xf32, #tpu.memory_space<vmem>>, vector<8x8x32xf32>,
    %c0_20 = arith.constant 0 : index
    %c0_21 = arith.constant 0 : index
    %c0_22 = arith.constant 0 : index
    %35 = vector.load %arg7[%c0_20, %c0_21, %c0_22] : memref<8x8x32xf32, #tpu.memory_space<vmem>>, vector<8x1x32xf32>
    %36 = vector.shape_cast %35 : vector<8x1x32xf32> to vector<8x32xf32>
    %c0_23 = arith.constant 0 : index
    %c1 = arith.constant 1 : index
    %c0_24 = arith.constant 0 : index
    %37 = vector.load %arg7[%c0_23, %c1, %c0_24] : memref<8x8x32xf32, #tpu.memory_space<vmem>>, vector<8x1x32xf32>
    %38 = vector.shape_cast %37 : vector<8x1x32xf32> to vector<8x32xf32>
    %c0_25 = arith.constant 0 : index
    %c2 = arith.constant 2 : index
    %c0_26 = arith.constant 0 : index
    %39 = vector.load %arg7[%c0_25, %c2, %c0_26] : memref<8x8x32xf32, #tpu.memory_space<vmem>>, vector<8x1x32xf32>
    %40 = vector.shape_cast %39 : vector<8x1x32xf32> to vector<8x32xf32>
    %c0_27 = arith.constant 0 : index
    %c3 = arith.constant 3 : index
    %c0_28 = arith.constant 0 : index
    %41 = vector.load %arg7[%c0_27, %c3, %c0_28] : memref<8x8x32xf32, #tpu.memory_space<vmem>>, vector<8x1x32xf32>
    %42 = vector.shape_cast %41 : vector<8x1x32xf32> to vector<8x32xf32>
    %c0_29 = arith.constant 0 : index
    %c4 = arith.constant 4 : index
    %c0_30 = arith.constant 0 : index
    %43 = vector.load %arg7[%c0_29, %c4, %c0_30] : memref<8x8x32xf32, #tpu.memory_space<vmem>>, vector<8x1x32xf32>
    %44 = vector.shape_cast %43 : vector<8x1x32xf32> to vector<8x32xf32>
    %c0_31 = arith.constant 0 : index
    %c5 = arith.constant 5 : index
    %c0_32 = arith.constant 0 : index
    %45 = vector.load %arg7[%c0_31, %c5, %c0_32] : memref<8x8x32xf32, #tpu.memory_space<vmem>>, vector<8x1x32xf32>
    %46 = vector.shape_cast %45 : vector<8x1x32xf32> to vector<8x32xf32>
    %c0_33 = arith.constant 0 : index
    %c6 = arith.constant 6 : index
    %c0_34 = arith.constant 0 : index
    %47 = vector.load %arg7[%c0_33, %c6, %c0_34] : memref<8x8x32xf32, #tpu.memory_space<vmem>>, vector<8x1x32xf32>
    %48 = vector.shape_cast %47 : vector<8x1x32xf32> to vector<8x32xf32>
    %c0_35 = arith.constant 0 : index
    %c7 = arith.constant 7 : index
    %c0_36 = arith.constant 0 : index
    %49 = vector.load %arg7[%c0_35, %c7, %c0_36] : memref<8x8x32xf32, #tpu.memory_space<vmem>>, vector<8x1x32xf32>
    %50 = vector.shape_cast %49 : vector<8x1x32xf32> to vector<8x32xf32>
    %51 = tpu.concatenate %36, %38, %40, %42, %44, %46, %48, %50 in 1 : vector<8x32xf32>, vector<8x32xf32>, vector<8x32xf32>, vector<8x32xf32>, vector<8x32xf32>, vector<8x32xf32>, vector<8x32xf32>, vector<8x32xf32> -> vector<8x256xf32>
    %c0_37 = arith.constant 0 : index
    %c0_38 = arith.constant 0 : index
    %52 = vector.load %arg6[%c0_37, %c0_38] : memref<8x256xf32, #tpu.memory_space<vmem>>, vector<8x256xf32>
    tpu.vector_store %arg6[%c0_37, %c0_38], %51 {strides = array<i32>} : memref<8x256xf32, #tpu.memory_space<vmem>>, vector<8x256xf32>,
    return
  }
  func.func @transform_0(%arg0: i32) -> (i32, i32, i32) {
    %c0_i32 = arith.constant 0 : i32
    %c0_i32_0 = arith.constant 0 : i32
    %c0_i32_1 = arith.constant 0 : i32
    return %arg0, %c0_i32, %c0_i32_0 : i32, i32, i32
  }
  func.func @transform_1(%arg0: i32) -> (i32, i32, i32) {
    %c0_i32 = arith.constant 0 : i32
    %c0_i32_0 = arith.constant 0 : i32
    %c0_i32_1 = arith.constant 0 : i32
    return %arg0, %c0_i32, %c0_i32_0 : i32, i32, i32
  }
  func.func @transform_2(%arg0: i32) -> (i32, i32) {
    %c0_i32 = arith.constant 0 : i32
    %c0_i32_0 = arith.constant 0 : i32
    return %arg0, %c0_i32 : i32, i32
  }
  func.func @transform_3(%arg0: i32) -> (i32, i32) {
    %c0_i32 = arith.constant 0 : i32
    %c0_i32_0 = arith.constant 0 : i32
    %c0_i32_1 = arith.constant 0 : i32
    return %c0_i32, %c0_i32_0 : i32, i32
  }
  func.func @transform_4(%arg0: i32) -> (i32, i32) {
    %c0_i32 = arith.constant 0 : i32
    %c0_i32_0 = arith.constant 0 : i32
    %c0_i32_1 = arith.constant 0 : i32
    return %c0_i32, %c0_i32_0 : i32, i32
  }
  func.func @transform_5(%arg0: i32) -> (i32, i32) {
    %c0_i32 = arith.constant 0 : i32
    %c0_i32_0 = arith.constant 0 : i32
    return %arg0, %c0_i32 : i32, i32
  }
}

</mosaic_0001>

<llo_original>
// kernel: tpu_custom_call.1
$region0: #{tpu_custom_call.1}
  #allocation0 [shape = 'u32[]', space=smem, size = 0x4, offset = 0x4, fixed_abs, tag = 'smem constant byte address 0x4 - core index']
  #allocation1 [shape = 'u32[144,128]{1,0:T(1,128)}', space=vmem, size = 0x12000, scoped, tag = 'internal scratch']
  #allocation2 [shape = 'f32[8,8,32]{2,1,0:T(8,128)}', space=vmem, size = 0x8000, scoped, tag = 'scratch operand']
  %s0 = inlined_call_operand.vmem [shape: f32[16,8,32], index: 0, kind: input, shape index: {}]
  %s1 = inlined_call_operand.hbm [shape: f32[16,32,64], index: 1, kind: input, shape index: {}]
  %s2 = inlined_call_operand.vmem [shape: f32[128,32], index: 2, kind: input, shape index: {}]
  %s3 = inlined_call_operand.hbm [shape: f32[96,96], index: 3, kind: input, shape index: {}]
  %s4 = inlined_call_operand.vmem [shape: f32[32,32], index: 4, kind: input, shape index: {}]
  %s5 = inlined_call_operand.hbm [shape: f32[16,256], index: 5, kind: output, shape index: {}]
  %s6 = sld [smem:[#allocation0]]
  $region61: #{tpu_custom_call.1} parent=0
    _
  %s8 = ssub.s32 1, %s6
  %s9 = scalar_select 0, %s8, %s6
  $region1: #{tpu_custom_call.1} parent=0
    #allocation3 [shape = 'u8[262144]{0}', space=vmem, size = 0x40000, scoped, tag = 'input window, operand 1']
    #allocation4 [shape = 's32[2]{0}', space=sflag, size = 0x8, scoped, tag = 'scoped memory for tpu_custom_call.1']
    #allocation5 [shape = 's32[2]{0}', space=sflag, size = 0x8, scoped, tag = 'scoped memory for tpu_custom_call.1']
    #allocation6 [shape = 'u8[49152]{0}', space=vmem, size = 0xc000, scoped, tag = 'input window, operand 3, single buffered']
    #allocation7 [shape = 's32[1]{0}', space=sflag, size = 0x4, scoped, tag = 'scoped memory for tpu_custom_call.1']
    #allocation8 [shape = 'u8[16384]{0}', space=vmem, size = 0x4000, scoped, tag = 'output window, operand 0']
    %10 = vsyncpa [#allocation4], 0
    %s11 = scalar_lea.sflag [#allocation4], 1
    %12 = vsyncpa %s11, 0
    %13 = vsyncpa [#allocation7], 0
    %14 = vsyncpa [#allocation5], 0
    %s15 = scalar_lea.sflag [#allocation5], 1
    %16 = vsyncpa %s15, 0
    loop: start=0, step=1, limit=4
    $region2: #{tpu_custom_call.1} parent=1 // loop_pre_header
      _
    $region3: #{tpu_custom_call.1} parent=1 // loop_header
      %s18 = sphi 0, %s22
      %p19 = scmp.ge.s32.totalorder %s18, 4
      %s28 = sphi 0, %s30
      %s31 = sphi 0, %s28
      %s32 = sphi 0, %s31
      %s48 = sphi 0, %s32
      %s54 = sphi 0, %s56
      %s57 = sphi 0, %s54
      %s58 = sphi 0, %s57
      %s74 = sphi 0, %s58
      %s80 = sphi 0, %s82
      %s83 = sphi 0, %s80
      %s84 = sphi 0, %s83
      %s100 = sphi 0, %s84
      %s104 = sphi 0, %s104
      %s106 = sphi 0, %s104
      %s107 = sphi 0, %s106
      %s121 = sphi 0, %s107
      %s125 = sphi 0, %s125
      %s127 = sphi 0, %s125
      %s128 = sphi 0, %s127
      %s142 = sphi 0, %s128
      %s148 = sphi 0, %s150
      %s151 = sphi 0, %s148
      %s152 = sphi 0, %s151
      %s168 = sphi 0, %s152
    $region4: #{tpu_custom_call.1} parent=1 // loop_header_branch
      %21 = sbr.rel (%p19) target = $region8
    $region5: #{tpu_custom_call.1} parent=1 // loop_body
      %s23 = ssub.s32 %s18, 1
      %s24 = ssub.s32 %s18, 2
      %s25 = sadd.s32 %s18, 1
      %s26 = ssub.s32 %s18, %s25
      %p27 = scmp.eq.s32.totalorder %s26, 0
      %s29 = sadd.s32 %s28, 1
      %s30 = scalar_select %p27, %s28, %s29
      %p33 = pneg %p27
      %p34 = scmp.eq.s32.totalorder %s18, 1
      %p35 = por %p33, %p34
      %p36 = scmp.ne.s32.totalorder %s28, %s31
      %p37 = scmp.eq.s32.totalorder %s18, 0
      %p38 = por %p36, %p37
      %p39 = scmp.ne.s32.totalorder %s28, %s31
      %p40 = scmp.eq.s32.totalorder %s23, 1
      %p41 = por %p39, %p40
      %p42 = scmp.ne.s32.totalorder %s31, %s32
      %p43 = scmp.eq.s32.totalorder %s23, 0
      %p44 = por %p42, %p43
      %p45 = scmp.ne.s32.totalorder %s31, %s32
      %p46 = scmp.eq.s32.totalorder %s24, 1
      %p47 = por %p45, %p46
      %p49 = scmp.ne.s32.totalorder %s32, %s48
      %p50 = scmp.eq.s32.totalorder %s24, 0
      %p51 = por %p49, %p50
      %s52 = ssub.s32 %s18, %s25
      %p53 = scmp.eq.s32.totalorder %s52, 0
      %s55 = sadd.s32 %s54, 1
      %s56 = scalar_select %p53, %s54, %s55
      %p59 = pneg %p53
      %p60 = scmp.eq.s32.totalorder %s18, 1
      %p61 = por %p59, %p60
      %p62 = scmp.ne.s32.totalorder %s54, %s57
      %p63 = scmp.eq.s32.totalorder %s18, 0
      %p64 = por %p62, %p63
      %p65 = scmp.ne.s32.totalorder %s54, %s57
      %p66 = scmp.eq.s32.totalorder %s23, 1
      %p67 = por %p65, %p66
      %p68 = scmp.ne.s32.totalorder %s57, %s58
      %p69 = scmp.eq.s32.totalorder %s23, 0
      %p70 = por %p68, %p69
      %p71 = scmp.ne.s32.totalorder %s57, %s58
      %p72 = scmp.eq.s32.totalorder %s24, 1
      %p73 = por %p71, %p72
      %p75 = scmp.ne.s32.totalorder %s58, %s74
      %p76 = scmp.eq.s32.totalorder %s24, 0
      %p77 = por %p75, %p76
      %s78 = ssub.s32 %s18, %s25
      %p79 = scmp.eq.s32.totalorder %s78, 0
      %s81 = sadd.s32 %s80, 1
      %s82 = scalar_select %p79, %s80, %s81
      %p85 = pneg %p79
      %p86 = scmp.eq.s32.totalorder %s18, 1
      %p87 = por %p85, %p86
      %p88 = scmp.ne.s32.totalorder %s80, %s83
      %p89 = scmp.eq.s32.totalorder %s18, 0
      %p90 = por %p88, %p89
      %p91 = scmp.ne.s32.totalorder %s80, %s83
      %p92 = scmp.eq.s32.totalorder %s23, 1
      %p93 = por %p91, %p92
      %p94 = scmp.ne.s32.totalorder %s83, %s84
      %p95 = scmp.eq.s32.totalorder %s23, 0
      %p96 = por %p94, %p95
      %p97 = scmp.ne.s32.totalorder %s83, %s84
      %p98 = scmp.eq.s32.totalorder %s24, 1
      %p99 = por %p97, %p98
      %p101 = scmp.ne.s32.totalorder %s84, %s100
      %p102 = scmp.eq.s32.totalorder %s24, 0
      %p103 = por %p101, %p102
      %s105 = sadd.s32 %s104, 1
      %p108 = scmp.eq.s32.totalorder %s18, 1
      %p109 = scmp.ne.s32.totalorder %s104, %s106
      %p110 = scmp.eq.s32.totalorder %s18, 0
      %p111 = por %p109, %p110
      %p112 = scmp.ne.s32.totalorder %s104, %s106
      %p113 = scmp.eq.s32.totalorder %s23, 1
      %p114 = por %p112, %p113
      %p115 = scmp.ne.s32.totalorder %s106, %s107
      %p116 = scmp.eq.s32.totalorder %s23, 0
      %p117 = por %p115, %p116
      %p118 = scmp.ne.s32.totalorder %s106, %s107
      %p119 = scmp.eq.s32.totalorder %s24, 1
      %p120 = por %p118, %p119
      %p122 = scmp.ne.s32.totalorder %s107, %s121
      %p123 = scmp.eq.s32.totalorder %s24, 0
      %p124 = por %p122, %p123
      %s126 = sadd.s32 %s125, 1
      %p129 = scmp.eq.s32.totalorder %s18, 1
      %p130 = scmp.ne.s32.totalorder %s125, %s127
      %p131 = scmp.eq.s32.totalorder %s18, 0
      %p132 = por %p130, %p131
      %p133 = scmp.ne.s32.totalorder %s125, %s127
      %p134 = scmp.eq.s32.totalorder %s23, 1
      %p135 = por %p133, %p134
      %p136 = scmp.ne.s32.totalorder %s127, %s128
      %p137 = scmp.eq.s32.totalorder %s23, 0
      %p138 = por %p136, %p137
      %p139 = scmp.ne.s32.totalorder %s127, %s128
      %p140 = scmp.eq.s32.totalorder %s24, 1
      %p141 = por %p139, %p140
      %p143 = scmp.ne.s32.totalorder %s128, %s142
      %p144 = scmp.eq.s32.totalorder %s24, 0
      %p145 = por %p143, %p144
      %s146 = ssub.s32 %s18, %s25
      %p147 = scmp.eq.s32.totalorder %s146, 0
      %s149 = sadd.s32 %s148, 1
      %s150 = scalar_select %p147, %s148, %s149
      %p153 = pneg %p147
      %p154 = scmp.eq.s32.totalorder %s18, 1
      %p155 = por %p153, %p154
      %p156 = scmp.ne.s32.totalorder %s148, %s151
      %p157 = scmp.eq.s32.totalorder %s18, 0
      %p158 = por %p156, %p157
      %p159 = scmp.ne.s32.totalorder %s148, %s151
      %p160 = scmp.eq.s32.totalorder %s23, 1
      %p161 = por %p159, %p160
      %p162 = scmp.ne.s32.totalorder %s151, %s152
      %p163 = scmp.eq.s32.totalorder %s23, 0
      %p164 = por %p162, %p163
      %p165 = scmp.ne.s32.totalorder %s151, %s152
      %p166 = scmp.eq.s32.totalorder %s24, 1
      %p167 = por %p165, %p166
      %p169 = scmp.ne.s32.totalorder %s152, %s168
      %p170 = scmp.eq.s32.totalorder %s24, 0
      %p171 = por %p169, %p170
      %p172 = scmp.le.s32.totalorder 1, %s18
      %p173 = scmp.lt.s32.totalorder %s18, 3
      %p174 = pnand %p172, %p173
      %p175 = pneg %p174
      // Predicated region
      $region9: #{tpu_custom_call.1} parent=5 // pred_check
        _
      $region10: #{tpu_custom_call.1} parent=5 // pred_check_branch
        %177 = sbr.rel (%p174) target = $region12
      $region11: #{tpu_custom_call.1} parent=5 // pred_region
        %s178 = ssub.s32 %s18, 1
        // Predicated region
        $region13: #{tpu_custom_call.1} parent=11 // pred_check
          %p179 = pneg %p117
        $region14: #{tpu_custom_call.1} parent=11 // pred_check_branch
          %181 = sbr.rel (%p179) target = $region16
        $region15: #{tpu_custom_call.1} parent=11 // pred_region
          %s183 = ssub.s32 1536, 1536
          %184 = vsyncadd [#allocation7], %s183
          %s185 = sshll.u32 [#allocation6], 4
          %s186 = int_to_ptr.vmem [resolvable:$true] %s185
          %191 = dma.hbm_to_vmem [thread:$0]  %s3, 1536, %s186, [#allocation7], 128, 128, 8
        $region16: #{tpu_custom_call.1} parent=11 // pred_fallthru
          _
        // Predicated region
        $region17: #{tpu_custom_call.1} parent=11 // pred_check
          %p192 = pneg %p138
        $region18: #{tpu_custom_call.1} parent=11 // pred_check_branch
          %194 = sbr.rel (%p192) target = $region20
        $region19: #{tpu_custom_call.1} parent=11 // pred_region
          _
        $region20: #{tpu_custom_call.1} parent=11 // pred_fallthru
          _
      $region12: #{tpu_custom_call.1} parent=5 // pred_fallthru
        _
      %p195 = scmp.lt.s32.totalorder %s18, 2
      // Predicated region
      $region21: #{tpu_custom_call.1} parent=5 // pred_check
        %p196 = pneg %p195
      $region22: #{tpu_custom_call.1} parent=5 // pred_check_branch
        %198 = sbr.rel (%p196) target = $region24
      $region23: #{tpu_custom_call.1} parent=5 // pred_region
        // Predicated region
        $region25: #{tpu_custom_call.1} parent=23 // pred_check
          %p199 = pneg %p38
        $region26: #{tpu_custom_call.1} parent=23 // pred_check_branch
          %201 = sbr.rel (%p199) target = $region28
        $region27: #{tpu_custom_call.1} parent=23 // pred_region
          %s202 = smul.u32 8, %s18
          %p203 = scmp.lt.s32.totalorder %s202, 15
          %s204 = scalar_select %p203, %s202, 15
          %s205 = smul.addr %s204, 8
          %s206 = scalar_lea.vmem %s0, %s205
          %s207 = smul.u32 8, %s18
        $region28: #{tpu_custom_call.1} parent=23 // pred_fallthru
          _
        // Predicated region
        $region29: #{tpu_custom_call.1} parent=23 // pred_check
          %p208 = pneg %p64
        $region30: #{tpu_custom_call.1} parent=23 // pred_check_branch
          %210 = sbr.rel (%p208) target = $region32
        $region31: #{tpu_custom_call.1} parent=23 // pred_region
          %s211 = sand.u32 %s54, 1
          %s212 = scalar_lea.sflag [#allocation4], %s211
          %s213 = sand.u32 %s54, 1
          %s214 = smul.addr %s213, 256
          %s215 = scalar_lea.vmem [#allocation3], %s214
          %s216 = smul.u32 8, %s18
          %s218 = ssub.s32 4096, 4096
          %219 = vsyncadd %s212, %s218
          %s220 = smul.addr %s216, 4
          %s221 = smul.addr %s220, 128
          %s222 = scalar_lea.hbm %s1, %s221
          %s223 = sshll.u32 %s215, 4
          %s224 = int_to_ptr.vmem [resolvable:$true] %s223
          %229 = dma.hbm_to_vmem [thread:$0]  %s222, 4096, %s224, %s212, 128, 128, 8
        $region32: #{tpu_custom_call.1} parent=23 // pred_fallthru
          _
        // Predicated region
        $region33: #{tpu_custom_call.1} parent=23 // pred_check
          %p230 = pneg %p90
        $region34: #{tpu_custom_call.1} parent=23 // pred_check_branch
          %232 = sbr.rel (%p230) target = $region36
        $region35: #{tpu_custom_call.1} parent=23 // pred_region
          %s233 = smul.u32 8, %s18
          %p234 = scmp.lt.s32.totalorder %s233, 15
          %s235 = scalar_select %p234, %s233, 15
          %s236 = smul.addr %s235, 8
          %s237 = scalar_lea.vmem %s2, %s236
          %s238 = smul.u32 8, %s18
        $region36: #{tpu_custom_call.1} parent=23 // pred_fallthru
          _
      $region24: #{tpu_custom_call.1} parent=5 // pred_fallthru
        _
      %p239 = scmp.le.s32.totalorder 1, %s18
      %p240 = scmp.lt.s32.totalorder %s18, 3
      %p241 = pnand %p239, %p240
      %p242 = pneg %p241
      // Predicated region
      $region37: #{tpu_custom_call.1} parent=5 // pred_check
        _
      $region38: #{tpu_custom_call.1} parent=5 // pred_check_branch
        %244 = sbr.rel (%p241) target = $region40
      $region39: #{tpu_custom_call.1} parent=5 // pred_region
        %s245 = ssub.s32 %s18, 1
        %s246 = sand.u32 %s57, 1
        %s247 = scalar_lea.sflag [#allocation4], %s246
        %s248 = sand.u32 %s57, 1
        %s249 = smul.addr %s248, 256
        %s250 = scalar_lea.vmem [#allocation3], %s249
        // Predicated region
        $region41: #{tpu_custom_call.1} parent=39 // pred_check
          %p251 = pneg %p70
        $region42: #{tpu_custom_call.1} parent=39 // pred_check_branch
          %253 = sbr.rel (%p251) target = $region44
        $region43: #{tpu_custom_call.1} parent=39 // pred_region
          %254 = dma.done %s247, 4096
        $region44: #{tpu_custom_call.1} parent=39 // pred_fallthru
          _
        // Predicated region
        $region45: #{tpu_custom_call.1} parent=39 // pred_check
          %p255 = pneg %p117
        $region46: #{tpu_custom_call.1} parent=39 // pred_check_branch
          %257 = sbr.rel (%p255) target = $region48
        $region47: #{tpu_custom_call.1} parent=39 // pred_region
          %258 = dma.done [#allocation7], 1536
        $region48: #{tpu_custom_call.1} parent=39 // pred_fallthru
          _
        %s259 = smul.u32 8, %s23
        %p260 = scmp.lt.s32.totalorder %s259, 15
        %s261 = scalar_select %p260, %s259, 15
        %s262 = smul.addr %s261, 8
        %s263 = scalar_lea.vmem %s0, %s262
        %p264 = pneg %p44
        %p265 = pneg %p41
        %s266 = sand.u32 %s57, 1
        %s267 = scalar_lea.sflag [#allocation4], %s266
        %s268 = sand.u32 %s57, 1
        %s269 = smul.addr %s268, 256
        %s270 = scalar_lea.vmem [#allocation3], %s269
        %p271 = pneg %p70
        %p272 = pneg %p67
        %s273 = smul.u32 8, %s23
        %p274 = scmp.lt.s32.totalorder %s273, 15
        %s275 = scalar_select %p274, %s273, 15
        %s276 = smul.addr %s275, 8
        %s277 = scalar_lea.vmem %s2, %s276
        %p278 = pneg %p96
        %p279 = pneg %p93
        %p280 = pneg %p117
        %p281 = pneg %p114
        %p282 = pneg %p138
        %p283 = pneg %p135
        %p284 = pneg %p164
        %p285 = pneg %p161
        %s286 = sand.u32 %s151, 1
        %s287 = scalar_lea.sflag [#allocation5], %s286
        %s288 = sand.u32 %s151, 1
        %s289 = smul.addr %s288, 16
        %s290 = scalar_lea.vmem [#allocation8], %s289
        %s291 = smul.u32 8, %s23
        %p292 = scmp.lt.s32.totalorder %s291, 15
        %s293 = scalar_select %p292, %s291, 15
        %s294 = smul.addr %s293, 8
        %s295 = scalar_lea.vmem %s0, %s294
        %s296 = smul.u32 8, %s23
        %s297 = smul.u32 8, %s23
        %s298 = smul.u32 8, %s23
        %p299 = scmp.lt.s32.totalorder %s298, 15
        %s300 = scalar_select %p299, %s298, 15
        %s301 = smul.addr %s300, 8
        %s302 = scalar_lea.vmem %s2, %s301
        %s303 = smul.u32 8, %s23
        %v304 = vld [vmem:[%s295] sm:$0xff]
        %v305 = vld [vmem:[%s295 + $0x8] sm:$0xff]
        %v306 = vld [vmem:[%s295 + $0x10] sm:$0xff]
        %v307 = vld [vmem:[%s295 + $0x18] sm:$0xff]
        %v308 = vld [vmem:[%s295 + $0x20] sm:$0xff]
        %v309 = vld [vmem:[%s295 + $0x28] sm:$0xff]
        %v310 = vld [vmem:[%s295 + $0x30] sm:$0xff]
        %v311 = vld [vmem:[%s295 + $0x38] sm:$0xff]
        %v312 = vld [vmem:[%s250] sm:$0xff]
        %v313 = vld [vmem:[%s250 + $0x8] sm:$0xff]
        %v314 = vld [vmem:[%s250 + $0x10] sm:$0xff]
        %v315 = vld [vmem:[%s250 + $0x18] sm:$0xff]
        %v316 = vld [vmem:[%s250 + $0x20] sm:$0xff]
        %v317 = vld [vmem:[%s250 + $0x28] sm:$0xff]
        %v318 = vld [vmem:[%s250 + $0x30] sm:$0xff]
        %v319 = vld [vmem:[%s250 + $0x38] sm:$0xff]
        %v320 = vld [vmem:[%s250 + $0x40] sm:$0xff]
        %v321 = vld [vmem:[%s250 + $0x48] sm:$0xff]
        %v322 = vld [vmem:[%s250 + $0x50] sm:$0xff]
        %v323 = vld [vmem:[%s250 + $0x58] sm:$0xff]
        %v324 = vld [vmem:[%s250 + $0x60] sm:$0xff]
        %v325 = vld [vmem:[%s250 + $0x68] sm:$0xff]
        %v326 = vld [vmem:[%s250 + $0x70] sm:$0xff]
        %v327 = vld [vmem:[%s250 + $0x78] sm:$0xff]
        %v328 = vld [vmem:[%s250 + $0x80] sm:$0xff]
        %v329 = vld [vmem:[%s250 + $0x88] sm:$0xff]
        %v330 = vld [vmem:[%s250 + $0x90] sm:$0xff]
        %v331 = vld [vmem:[%s250 + $0x98] sm:$0xff]
        %v332 = vld [vmem:[%s250 + $0xa0] sm:$0xff]
        %v333 = vld [vmem:[%s250 + $0xa8] sm:$0xff]
        %v334 = vld [vmem:[%s250 + $0xb0] sm:$0xff]
        %v335 = vld [vmem:[%s250 + $0xb8] sm:$0xff]
        %v336 = vld [vmem:[%s250 + $0xc0] sm:$0xff]
        %v337 = vld [vmem:[%s250 + $0xc8] sm:$0xff]
        %v338 = vld [vmem:[%s250 + $0xd0] sm:$0xff]
        %v339 = vld [vmem:[%s250 + $0xd8] sm:$0xff]
        %v340 = vld [vmem:[%s250 + $0xe0] sm:$0xff]
        %v341 = vld [vmem:[%s250 + $0xe8] sm:$0xff]
        %v342 = vld [vmem:[%s250 + $0xf0] sm:$0xff]
        %v343 = vld [vmem:[%s250 + $0xf8] sm:$0xff]
        %vm344 = vcmask 261120
        %v346 = vsel %vm344, %v304, 0
        %348 = vmatprep.subr.mxu0 0.0
        %349 = vmatpush1.msra.mxu0 0.0
        %350 = vmatprep.subr.mxu0 0.0
        %351 = vmatpush1.msra.mxu0 0.0
        %352 = vmatprep.subr.mxu0 0.0
        %353 = vmatpush1.msra.mxu0 0.0
        %354 = vmatprep.subr.mxu0 0.0
        %355 = vmatpush1.msra.mxu0 0.0
        %356 = vmatprep.subr.mxu0 0.0
        %357 = vmatpush1.msra.mxu0 0.0
        %358 = vmatprep.subr.mxu0 0.0
        %359 = vmatpush1.msra.mxu0 0.0
        %360 = vmatprep.subr.mxu0 0.0
        %361 = vmatpush1.msra.mxu0 0.0
        %362 = vmatprep.subr.mxu0 0.0
        %363 = vmatpush1.msra.mxu0 0.0
        %364 = vmatprep.subr.mxu0 0.0
        %365 = vmatpush1.msra.mxu0 0.0
        %366 = vmatprep.subr.mxu0 0.0
        %367 = vmatpush1.msra.mxu0 0.0
        %368 = vmatprep.subr.mxu0 0.0
        %369 = vmatpush1.msra.mxu0 0.0
        %370 = vmatprep.subr.mxu0 0.0
        %371 = vmatpush1.msra.mxu0 0.0
        %372 = vmatprep.subr.mxu0 0.0
        %373 = vmatpush1.msra.mxu0 %v315
        %374 = vmatprep.subr.mxu0 0.0
        %375 = vmatpush1.msra.mxu0 %v314
        %376 = vmatprep.subr.mxu0 0.0
        %377 = vmatpush1.msra.mxu0 %v313
        %378 = vmatprep.subr.mxu0 0.0
        %379 = vmatpush1.msra.mxu0 %v312
        %380 = vmatprep.subr.mxu0 0.0
        %381 = vmatpush2.msra.mxu0 0.0
        %382 = vmatprep.subr.mxu0 0.0
        %383 = vmatpush2.msra.mxu0 0.0
        %384 = vmatprep.subr.mxu0 0.0
        %385 = vmatpush2.msra.mxu0 0.0
        %386 = vmatprep.subr.mxu0 0.0
        %387 = vmatpush2.msra.mxu0 0.0
        %388 = vmatprep.subr.mxu0 0.0
        %389 = vmatpush2.msra.mxu0 0.0
        %390 = vmatprep.subr.mxu0 0.0
        %391 = vmatpush2.msra.mxu0 0.0
        %392 = vmatprep.subr.mxu0 0.0
        %393 = vmatpush2.msra.mxu0 0.0
        %394 = vmatprep.subr.mxu0 0.0
        %395 = vmatpush2.msra.mxu0 0.0
        %396 = vmatprep.subr.mxu0 0.0
        %397 = vmatpush2.msra.mxu0 0.0
        %398 = vmatprep.subr.mxu0 0.0
        %399 = vmatpush2.msra.mxu0 0.0
        %400 = vmatprep.subr.mxu0 0.0
        %401 = vmatpush2.msra.mxu0 0.0
        %402 = vmatprep.subr.mxu0 0.0
        %403 = vmatpush2.msra.mxu0 0.0
        %404 = vmatprep.subr.mxu0 0.0
        %405 = vmatpush2.msra.mxu0 0.0
        %406 = vmatprep.subr.mxu0 0.0
        %407 = vmatpush2.msra.mxu0 0.0
        %408 = vmatprep.subr.mxu0 0.0
        %409 = vmatpush2.msra.mxu0 0.0
        %410 = vmatprep.subr.mxu0 0.0
        %411 = vmatpush2.msra.mxu0 0.0
        %412 = vmatprep.mubr.f32.mxu0 0.0
        %413 = vmatmul.mubr.f32.gmra.mxu0 %v346
        %v414 = vpop.f32.mrf.mxu0
        %v415 = vadd.f32 0.0, %v414
        %v416 = vpop.f32.mrf.mxu0
        %417 = vdwg.mxu0
        %v419 = vsel %vm344, %v305, 0
        %421 = vmatprep.subr.mxu0 0.0
        %422 = vmatpush1.msra.mxu0 0.0
        %423 = vmatprep.subr.mxu0 0.0
        %424 = vmatpush1.msra.mxu0 0.0
        %425 = vmatprep.subr.mxu0 0.0
        %426 = vmatpush1.msra.mxu0 0.0
        %427 = vmatprep.subr.mxu0 0.0
        %428 = vmatpush1.msra.mxu0 0.0
        %429 = vmatprep.subr.mxu0 0.0
        %430 = vmatpush1.msra.mxu0 0.0
        %431 = vmatprep.subr.mxu0 0.0
        %432 = vmatpush1.msra.mxu0 0.0
        %433 = vmatprep.subr.mxu0 0.0
        %434 = vmatpush1.msra.mxu0 0.0
        %435 = vmatprep.subr.mxu0 0.0
        %436 = vmatpush1.msra.mxu0 0.0
        %437 = vmatprep.subr.mxu0 0.0
        %438 = vmatpush1.msra.mxu0 0.0
        %439 = vmatprep.subr.mxu0 0.0
        %440 = vmatpush1.msra.mxu0 0.0
        %441 = vmatprep.subr.mxu0 0.0
        %442 = vmatpush1.msra.mxu0 0.0
        %443 = vmatprep.subr.mxu0 0.0
        %444 = vmatpush1.msra.mxu0 0.0
        %445 = vmatprep.subr.mxu0 0.0
        %446 = vmatpush1.msra.mxu0 %v319
        %447 = vmatprep.subr.mxu0 0.0
        %448 = vmatpush1.msra.mxu0 %v318
        %449 = vmatprep.subr.mxu0 0.0
        %450 = vmatpush1.msra.mxu0 %v317
        %451 = vmatprep.subr.mxu0 0.0
        %452 = vmatpush1.msra.mxu0 %v316
        %453 = vmatprep.subr.mxu0 0.0
        %454 = vmatpush2.msra.mxu0 0.0
        %455 = vmatprep.subr.mxu0 0.0
        %456 = vmatpush2.msra.mxu0 0.0
        %457 = vmatprep.subr.mxu0 0.0
        %458 = vmatpush2.msra.mxu0 0.0
        %459 = vmatprep.subr.mxu0 0.0
        %460 = vmatpush2.msra.mxu0 0.0
        %461 = vmatprep.subr.mxu0 0.0
        %462 = vmatpush2.msra.mxu0 0.0
        %463 = vmatprep.subr.mxu0 0.0
        %464 = vmatpush2.msra.mxu0 0.0
        %465 = vmatprep.subr.mxu0 0.0
        %466 = vmatpush2.msra.mxu0 0.0
        %467 = vmatprep.subr.mxu0 0.0
        %468 = vmatpush2.msra.mxu0 0.0
        %469 = vmatprep.subr.mxu0 0.0
        %470 = vmatpush2.msra.mxu0 0.0
        %471 = vmatprep.subr.mxu0 0.0
        %472 = vmatpush2.msra.mxu0 0.0
        %473 = vmatprep.subr.mxu0 0.0
        %474 = vmatpush2.msra.mxu0 0.0
        %475 = vmatprep.subr.mxu0 0.0
        %476 = vmatpush2.msra.mxu0 0.0
        %477 = vmatprep.subr.mxu0 0.0
        %478 = vmatpush2.msra.mxu0 0.0
        %479 = vmatprep.subr.mxu0 0.0
        %480 = vmatpush2.msra.mxu0 0.0
        %481 = vmatprep.subr.mxu0 0.0
        %482 = vmatpush2.msra.mxu0 0.0
        %483 = vmatprep.subr.mxu0 0.0
        %484 = vmatpush2.msra.mxu0 0.0
        %485 = vmatprep.mubr.f32.mxu0 0.0
        %486 = vmatmul.mubr.f32.gmra.mxu0 %v419
        %v487 = vpop.f32.mrf.mxu0
        %v488 = vadd.f32 0.0, %v487
        %v489 = vpop.f32.mrf.mxu0
        %490 = vdwg.mxu0
        %v492 = vsel %vm344, %v306, 0
        %494 = vmatprep.subr.mxu0 0.0
        %495 = vmatpush1.msra.mxu0 0.0
        %496 = vmatprep.subr.mxu0 0.0
        %497 = vmatpush1.msra.mxu0 0.0
        %498 = vmatprep.subr.mxu0 0.0
        %499 = vmatpush1.msra.mxu0 0.0
        %500 = vmatprep.subr.mxu0 0.0
        %501 = vmatpush1.msra.mxu0 0.0
        %502 = vmatprep.subr.mxu0 0.0
        %503 = vmatpush1.msra.mxu0 0.0
        %504 = vmatprep.subr.mxu0 0.0
        %505 = vmatpush1.msra.mxu0 0.0
        %506 = vmatprep.subr.mxu0 0.0
        %507 = vmatpush1.msra.mxu0 0.0
        %508 = vmatprep.subr.mxu0 0.0
        %509 = vmatpush1.msra.mxu0 0.0
        %510 = vmatprep.subr.mxu0 0.0
        %511 = vmatpush1.msra.mxu0 0.0
        %512 = vmatprep.subr.mxu0 0.0
        %513 = vmatpush1.msra.mxu0 0.0
        %514 = vmatprep.subr.mxu0 0.0
        %515 = vmatpush1.msra.mxu0 0.0
        %516 = vmatprep.subr.mxu0 0.0
        %517 = vmatpush1.msra.mxu0 0.0
        %518 = vmatprep.subr.mxu0 0.0
        %519 = vmatpush1.msra.mxu0 %v323
        %520 = vmatprep.subr.mxu0 0.0
        %521 = vmatpush1.msra.mxu0 %v322
        %522 = vmatprep.subr.mxu0 0.0
        %523 = vmatpush1.msra.mxu0 %v321
        %524 = vmatprep.subr.mxu0 0.0
        %525 = vmatpush1.msra.mxu0 %v320
        %526 = vmatprep.subr.mxu0 0.0
        %527 = vmatpush2.msra.mxu0 0.0
        %528 = vmatprep.subr.mxu0 0.0
        %529 = vmatpush2.msra.mxu0 0.0
        %530 = vmatprep.subr.mxu0 0.0
        %531 = vmatpush2.msra.mxu0 0.0
        %532 = vmatprep.subr.mxu0 0.0
        %533 = vmatpush2.msra.mxu0 0.0
        %534 = vmatprep.subr.mxu0 0.0
        %535 = vmatpush2.msra.mxu0 0.0
        %536 = vmatprep.subr.mxu0 0.0
        %537 = vmatpush2.msra.mxu0 0.0
        %538 = vmatprep.subr.mxu0 0.0
        %539 = vmatpush2.msra.mxu0 0.0
        %540 = vmatprep.subr.mxu0 0.0
        %541 = vmatpush2.msra.mxu0 0.0
        %542 = vmatprep.subr.mxu0 0.0
        %543 = vmatpush2.msra.mxu0 0.0
        %544 = vmatprep.subr.mxu0 0.0
        %545 = vmatpush2.msra.mxu0 0.0
        %546 = vmatprep.subr.mxu0 0.0
        %547 = vmatpush2.msra.mxu0 0.0
        %548 = vmatprep.subr.mxu0 0.0
        %549 = vmatpush2.msra.mxu0 0.0
        %550 = vmatprep.subr.mxu0 0.0
        %551 = vmatpush2.msra.mxu0 0.0
        %552 = vmatprep.subr.mxu0 0.0
        %553 = vmatpush2.msra.mxu0 0.0
        %554 = vmatprep.subr.mxu0 0.0
        %555 = vmatpush2.msra.mxu0 0.0
        %556 = vmatprep.subr.mxu0 0.0
        %557 = vmatpush2.msra.mxu0 0.0
        %558 = vmatprep.mubr.f32.mxu0 0.0
        %559 = vmatmul.mubr.f32.gmra.mxu0 %v492
        %v560 = vpop.f32.mrf.mxu0
        %v561 = vadd.f32 0.0, %v560
        %v562 = vpop.f32.mrf.mxu0
        %563 = vdwg.mxu0
        %v565 = vsel %vm344, %v307, 0
        %567 = vmatprep.subr.mxu0 0.0
        %568 = vmatpush1.msra.mxu0 0.0
        %569 = vmatprep.subr.mxu0 0.0
        %570 = vmatpush1.msra.mxu0 0.0
        %571 = vmatprep.subr.mxu0 0.0
        %572 = vmatpush1.msra.mxu0 0.0
        %573 = vmatprep.subr.mxu0 0.0
        %574 = vmatpush1.msra.mxu0 0.0
        %575 = vmatprep.subr.mxu0 0.0
        %576 = vmatpush1.msra.mxu0 0.0
        %577 = vmatprep.subr.mxu0 0.0
        %578 = vmatpush1.msra.mxu0 0.0
        %579 = vmatprep.subr.mxu0 0.0
        %580 = vmatpush1.msra.mxu0 0.0
        %581 = vmatprep.subr.mxu0 0.0
        %582 = vmatpush1.msra.mxu0 0.0
        %583 = vmatprep.subr.mxu0 0.0
        %584 = vmatpush1.msra.mxu0 0.0
        %585 = vmatprep.subr.mxu0 0.0
        %586 = vmatpush1.msra.mxu0 0.0
        %587 = vmatprep.subr.mxu0 0.0
        %588 = vmatpush1.msra.mxu0 0.0
        %589 = vmatprep.subr.mxu0 0.0
        %590 = vmatpush1.msra.mxu0 0.0
        %591 = vmatprep.subr.mxu0 0.0
        %592 = vmatpush1.msra.mxu0 %v327
        %593 = vmatprep.subr.mxu0 0.0
        %594 = vmatpush1.msra.mxu0 %v326
        %595 = vmatprep.subr.mxu0 0.0
        %596 = vmatpush1.msra.mxu0 %v325
        %597 = vmatprep.subr.mxu0 0.0
        %598 = vmatpush1.msra.mxu0 %v324
        %599 = vmatprep.subr.mxu0 0.0
        %600 = vmatpush2.msra.mxu0 0.0
        %601 = vmatprep.subr.mxu0 0.0
        %602 = vmatpush2.msra.mxu0 0.0
        %603 = vmatprep.subr.mxu0 0.0
        %604 = vmatpush2.msra.mxu0 0.0
        %605 = vmatprep.subr.mxu0 0.0
        %606 = vmatpush2.msra.mxu0 0.0
        %607 = vmatprep.subr.mxu0 0.0
        %608 = vmatpush2.msra.mxu0 0.0
        %609 = vmatprep.subr.mxu0 0.0
        %610 = vmatpush2.msra.mxu0 0.0
        %611 = vmatprep.subr.mxu0 0.0
        %612 = vmatpush2.msra.mxu0 0.0
        %613 = vmatprep.subr.mxu0 0.0
        %614 = vmatpush2.msra.mxu0 0.0
        %615 = vmatprep.subr.mxu0 0.0
        %616 = vmatpush2.msra.mxu0 0.0
        %617 = vmatprep.subr.mxu0 0.0
        %618 = vmatpush2.msra.mxu0 0.0
        %619 = vmatprep.subr.mxu0 0.0
        %620 = vmatpush2.msra.mxu0 0.0
        %621 = vmatprep.subr.mxu0 0.0
        %622 = vmatpush2.msra.mxu0 0.0
        %623 = vmatprep.subr.mxu0 0.0
        %624 = vmatpush2.msra.mxu0 0.0
        %625 = vmatprep.subr.mxu0 0.0
        %626 = vmatpush2.msra.mxu0 0.0
        %627 = vmatprep.subr.mxu0 0.0
        %628 = vmatpush2.msra.mxu0 0.0
        %629 = vmatprep.subr.mxu0 0.0
        %630 = vmatpush2.msra.mxu0 0.0
        %631 = vmatprep.mubr.f32.mxu0 0.0
        %632 = vmatmul.mubr.f32.gmra.mxu0 %v565
        %v633 = vpop.f32.mrf.mxu0
        %v634 = vadd.f32 0.0, %v633
        %v635 = vpop.f32.mrf.mxu0
        %636 = vdwg.mxu0
        %v638 = vsel %vm344, %v308, 0
        %640 = vmatprep.subr.mxu0 0.0
        %641 = vmatpush1.msra.mxu0 0.0
        %642 = vmatprep.subr.mxu0 0.0
        %643 = vmatpush1.msra.mxu0 0.0
        %644 = vmatprep.subr.mxu0 0.0
        %645 = vmatpush1.msra.mxu0 0.0
        %646 = vmatprep.subr.mxu0 0.0
        %647 = vmatpush1.msra.mxu0 0.0
        %648 = vmatprep.subr.mxu0 0.0
        %649 = vmatpush1.msra.mxu0 0.0
        %650 = vmatprep.subr.mxu0 0.0
        %651 = vmatpush1.msra.mxu0 0.0
        %652 = vmatprep.subr.mxu0 0.0
        %653 = vmatpush1.msra.mxu0 0.0
        %654 = vmatprep.subr.mxu0 0.0
        %655 = vmatpush1.msra.mxu0 0.0
        %656 = vmatprep.subr.mxu0 0.0
        %657 = vmatpush1.msra.mxu0 0.0
        %658 = vmatprep.subr.mxu0 0.0
        %659 = vmatpush1.msra.mxu0 0.0
        %660 = vmatprep.subr.mxu0 0.0
        %661 = vmatpush1.msra.mxu0 0.0
        %662 = vmatprep.subr.mxu0 0.0
        %663 = vmatpush1.msra.mxu0 0.0
        %664 = vmatprep.subr.mxu0 0.0
        %665 = vmatpush1.msra.mxu0 %v331
        %666 = vmatprep.subr.mxu0 0.0
        %667 = vmatpush1.msra.mxu0 %v330
        %668 = vmatprep.subr.mxu0 0.0
        %669 = vmatpush1.msra.mxu0 %v329
        %670 = vmatprep.subr.mxu0 0.0
        %671 = vmatpush1.msra.mxu0 %v328
        %672 = vmatprep.subr.mxu0 0.0
        %673 = vmatpush2.msra.mxu0 0.0
        %674 = vmatprep.subr.mxu0 0.0
        %675 = vmatpush2.msra.mxu0 0.0
        %676 = vmatprep.subr.mxu0 0.0
        %677 = vmatpush2.msra.mxu0 0.0
        %678 = vmatprep.subr.mxu0 0.0
        %679 = vmatpush2.msra.mxu0 0.0
        %680 = vmatprep.subr.mxu0 0.0
        %681 = vmatpush2.msra.mxu0 0.0
        %682 = vmatprep.subr.mxu0 0.0
        %683 = vmatpush2.msra.mxu0 0.0
        %684 = vmatprep.subr.mxu0 0.0
        %685 = vmatpush2.msra.mxu0 0.0
        %686 = vmatprep.subr.mxu0 0.0
        %687 = vmatpush2.msra.mxu0 0.0
        %688 = vmatprep.subr.mxu0 0.0
        %689 = vmatpush2.msra.mxu0 0.0
        %690 = vmatprep.subr.mxu0 0.0
        %691 = vmatpush2.msra.mxu0 0.0
        %692 = vmatprep.subr.mxu0 0.0
        %693 = vmatpush2.msra.mxu0 0.0
        %694 = vmatprep.subr.mxu0 0.0
        %695 = vmatpush2.msra.mxu0 0.0
        %696 = vmatprep.subr.mxu0 0.0
        %697 = vmatpush2.msra.mxu0 0.0
        %698 = vmatprep.subr.mxu0 0.0
        %699 = vmatpush2.msra.mxu0 0.0
        %700 = vmatprep.subr.mxu0 0.0
        %701 = vmatpush2.msra.mxu0 0.0
        %702 = vmatprep.subr.mxu0 0.0
        %703 = vmatpush2.msra.mxu0 0.0
        %704 = vmatprep.mubr.f32.mxu0 0.0
        %705 = vmatmul.mubr.f32.gmra.mxu0 %v638
        %v706 = vpop.f32.mrf.mxu0
        %v707 = vadd.f32 0.0, %v706
        %v708 = vpop.f32.mrf.mxu0
        %709 = vdwg.mxu0
        %v711 = vsel %vm344, %v309, 0
        %713 = vmatprep.subr.mxu0 0.0
        %714 = vmatpush1.msra.mxu0 0.0
        %715 = vmatprep.subr.mxu0 0.0
        %716 = vmatpush1.msra.mxu0 0.0
        %717 = vmatprep.subr.mxu0 0.0
        %718 = vmatpush1.msra.mxu0 0.0
        %719 = vmatprep.subr.mxu0 0.0
        %720 = vmatpush1.msra.mxu0 0.0
        %721 = vmatprep.subr.mxu0 0.0
        %722 = vmatpush1.msra.mxu0 0.0
        %723 = vmatprep.subr.mxu0 0.0
        %724 = vmatpush1.msra.mxu0 0.0
        %725 = vmatprep.subr.mxu0 0.0
        %726 = vmatpush1.msra.mxu0 0.0
        %727 = vmatprep.subr.mxu0 0.0
        %728 = vmatpush1.msra.mxu0 0.0
        %729 = vmatprep.subr.mxu0 0.0
        %730 = vmatpush1.msra.mxu0 0.0
        %731 = vmatprep.subr.mxu0 0.0
        %732 = vmatpush1.msra.mxu0 0.0
        %733 = vmatprep.subr.mxu0 0.0
        %734 = vmatpush1.msra.mxu0 0.0
        %735 = vmatprep.subr.mxu0 0.0
        %736 = vmatpush1.msra.mxu0 0.0
        %737 = vmatprep.subr.mxu0 0.0
        %738 = vmatpush1.msra.mxu0 %v335
        %739 = vmatprep.subr.mxu0 0.0
        %740 = vmatpush1.msra.mxu0 %v334
        %741 = vmatprep.subr.mxu0 0.0
        %742 = vmatpush1.msra.mxu0 %v333
        %743 = vmatprep.subr.mxu0 0.0
        %744 = vmatpush1.msra.mxu0 %v332
        %745 = vmatprep.subr.mxu0 0.0
        %746 = vmatpush2.msra.mxu0 0.0
        %747 = vmatprep.subr.mxu0 0.0
        %748 = vmatpush2.msra.mxu0 0.0
        %749 = vmatprep.subr.mxu0 0.0
        %750 = vmatpush2.msra.mxu0 0.0
        %751 = vmatprep.subr.mxu0 0.0
        %752 = vmatpush2.msra.mxu0 0.0
        %753 = vmatprep.subr.mxu0 0.0
        %754 = vmatpush2.msra.mxu0 0.0
        %755 = vmatprep.subr.mxu0 0.0
        %756 = vmatpush2.msra.mxu0 0.0
        %757 = vmatprep.subr.mxu0 0.0
        %758 = vmatpush2.msra.mxu0 0.0
        %759 = vmatprep.subr.mxu0 0.0
        %760 = vmatpush2.msra.mxu0 0.0
        %761 = vmatprep.subr.mxu0 0.0
        %762 = vmatpush2.msra.mxu0 0.0
        %763 = vmatprep.subr.mxu0 0.0
        %764 = vmatpush2.msra.mxu0 0.0
        %765 = vmatprep.subr.mxu0 0.0
        %766 = vmatpush2.msra.mxu0 0.0
        %767 = vmatprep.subr.mxu0 0.0
        %768 = vmatpush2.msra.mxu0 0.0
        %769 = vmatprep.subr.mxu0 0.0
        %770 = vmatpush2.msra.mxu0 0.0
        %771 = vmatprep.subr.mxu0 0.0
        %772 = vmatpush2.msra.mxu0 0.0
        %773 = vmatprep.subr.mxu0 0.0
        %774 = vmatpush2.msra.mxu0 0.0
        %775 = vmatprep.subr.mxu0 0.0
        %776 = vmatpush2.msra.mxu0 0.0
        %777 = vmatprep.mubr.f32.mxu0 0.0
        %778 = vmatmul.mubr.f32.gmra.mxu0 %v711
        %v779 = vpop.f32.mrf.mxu0
        %v780 = vadd.f32 0.0, %v779
        %v781 = vpop.f32.mrf.mxu0
        %782 = vdwg.mxu0
        %v784 = vsel %vm344, %v310, 0
        %786 = vmatprep.subr.mxu0 0.0
        %787 = vmatpush1.msra.mxu0 0.0
        %788 = vmatprep.subr.mxu0 0.0
        %789 = vmatpush1.msra.mxu0 0.0
        %790 = vmatprep.subr.mxu0 0.0
        %791 = vmatpush1.msra.mxu0 0.0
        %792 = vmatprep.subr.mxu0 0.0
        %793 = vmatpush1.msra.mxu0 0.0
        %794 = vmatprep.subr.mxu0 0.0
        %795 = vmatpush1.msra.mxu0 0.0
        %796 = vmatprep.subr.mxu0 0.0
        %797 = vmatpush1.msra.mxu0 0.0
        %798 = vmatprep.subr.mxu0 0.0
        %799 = vmatpush1.msra.mxu0 0.0
        %800 = vmatprep.subr.mxu0 0.0
        %801 = vmatpush1.msra.mxu0 0.0
        %802 = vmatprep.subr.mxu0 0.0
        %803 = vmatpush1.msra.mxu0 0.0
        %804 = vmatprep.subr.mxu0 0.0
        %805 = vmatpush1.msra.mxu0 0.0
        %806 = vmatprep.subr.mxu0 0.0
        %807 = vmatpush1.msra.mxu0 0.0
        %808 = vmatprep.subr.mxu0 0.0
        %809 = vmatpush1.msra.mxu0 0.0
        %810 = vmatprep.subr.mxu0 0.0
        %811 = vmatpush1.msra.mxu0 %v339
        %812 = vmatprep.subr.mxu0 0.0
        %813 = vmatpush1.msra.mxu0 %v338
        %814 = vmatprep.subr.mxu0 0.0
        %815 = vmatpush1.msra.mxu0 %v337
        %816 = vmatprep.subr.mxu0 0.0
        %817 = vmatpush1.msra.mxu0 %v336
        %818 = vmatprep.subr.mxu0 0.0
        %819 = vmatpush2.msra.mxu0 0.0
        %820 = vmatprep.subr.mxu0 0.0
        %821 = vmatpush2.msra.mxu0 0.0
        %822 = vmatprep.subr.mxu0 0.0
        %823 = vmatpush2.msra.mxu0 0.0
        %824 = vmatprep.subr.mxu0 0.0
        %825 = vmatpush2.msra.mxu0 0.0
        %826 = vmatprep.subr.mxu0 0.0
        %827 = vmatpush2.msra.mxu0 0.0
        %828 = vmatprep.subr.mxu0 0.0
        %829 = vmatpush2.msra.mxu0 0.0
        %830 = vmatprep.subr.mxu0 0.0
        %831 = vmatpush2.msra.mxu0 0.0
        %832 = vmatprep.subr.mxu0 0.0
        %833 = vmatpush2.msra.mxu0 0.0
        %834 = vmatprep.subr.mxu0 0.0
        %835 = vmatpush2.msra.mxu0 0.0
        %836 = vmatprep.subr.mxu0 0.0
        %837 = vmatpush2.msra.mxu0 0.0
        %838 = vmatprep.subr.mxu0 0.0
        %839 = vmatpush2.msra.mxu0 0.0
        %840 = vmatprep.subr.mxu0 0.0
        %841 = vmatpush2.msra.mxu0 0.0
        %842 = vmatprep.subr.mxu0 0.0
        %843 = vmatpush2.msra.mxu0 0.0
        %844 = vmatprep.subr.mxu0 0.0
        %845 = vmatpush2.msra.mxu0 0.0
        %846 = vmatprep.subr.mxu0 0.0
        %847 = vmatpush2.msra.mxu0 0.0
        %848 = vmatprep.subr.mxu0 0.0
        %849 = vmatpush2.msra.mxu0 0.0
        %850 = vmatprep.mubr.f32.mxu0 0.0
        %851 = vmatmul.mubr.f32.gmra.mxu0 %v784
        %v852 = vpop.f32.mrf.mxu0
        %v853 = vadd.f32 0.0, %v852
        %v854 = vpop.f32.mrf.mxu0
        %855 = vdwg.mxu0
        %v857 = vsel %vm344, %v311, 0
        %859 = vmatprep.subr.mxu0 0.0
        %860 = vmatpush1.msra.mxu0 0.0
        %861 = vmatprep.subr.mxu0 0.0
        %862 = vmatpush1.msra.mxu0 0.0
        %863 = vmatprep.subr.mxu0 0.0
        %864 = vmatpush1.msra.mxu0 0.0
        %865 = vmatprep.subr.mxu0 0.0
        %866 = vmatpush1.msra.mxu0 0.0
        %867 = vmatprep.subr.mxu0 0.0
        %868 = vmatpush1.msra.mxu0 0.0
        %869 = vmatprep.subr.mxu0 0.0
        %870 = vmatpush1.msra.mxu0 0.0
        %871 = vmatprep.subr.mxu0 0.0
        %872 = vmatpush1.msra.mxu0 0.0
        %873 = vmatprep.subr.mxu0 0.0
        %874 = vmatpush1.msra.mxu0 0.0
        %875 = vmatprep.subr.mxu0 0.0
        %876 = vmatpush1.msra.mxu0 0.0
        %877 = vmatprep.subr.mxu0 0.0
        %878 = vmatpush1.msra.mxu0 0.0
        %879 = vmatprep.subr.mxu0 0.0
        %880 = vmatpush1.msra.mxu0 0.0
        %881 = vmatprep.subr.mxu0 0.0
        %882 = vmatpush1.msra.mxu0 0.0
        %883 = vmatprep.subr.mxu0 0.0
        %884 = vmatpush1.msra.mxu0 %v343
        %885 = vmatprep.subr.mxu0 0.0
        %886 = vmatpush1.msra.mxu0 %v342
        %887 = vmatprep.subr.mxu0 0.0
        %888 = vmatpush1.msra.mxu0 %v341
        %889 = vmatprep.subr.mxu0 0.0
        %890 = vmatpush1.msra.mxu0 %v340
        %891 = vmatprep.subr.mxu0 0.0
        %892 = vmatpush2.msra.mxu0 0.0
        %893 = vmatprep.subr.mxu0 0.0
        %894 = vmatpush2.msra.mxu0 0.0
        %895 = vmatprep.subr.mxu0 0.0
        %896 = vmatpush2.msra.mxu0 0.0
        %897 = vmatprep.subr.mxu0 0.0
        %898 = vmatpush2.msra.mxu0 0.0
        %899 = vmatprep.subr.mxu0 0.0
        %900 = vmatpush2.msra.mxu0 0.0
        %901 = vmatprep.subr.mxu0 0.0
        %902 = vmatpush2.msra.mxu0 0.0
        %903 = vmatprep.subr.mxu0 0.0
        %904 = vmatpush2.msra.mxu0 0.0
        %905 = vmatprep.subr.mxu0 0.0
        %906 = vmatpush2.msra.mxu0 0.0
        %907 = vmatprep.subr.mxu0 0.0
        %908 = vmatpush2.msra.mxu0 0.0
        %909 = vmatprep.subr.mxu0 0.0
        %910 = vmatpush2.msra.mxu0 0.0
        %911 = vmatprep.subr.mxu0 0.0
        %912 = vmatpush2.msra.mxu0 0.0
        %913 = vmatprep.subr.mxu0 0.0
        %914 = vmatpush2.msra.mxu0 0.0
        %915 = vmatprep.subr.mxu0 0.0
        %916 = vmatpush2.msra.mxu0 0.0
        %917 = vmatprep.subr.mxu0 0.0
        %918 = vmatpush2.msra.mxu0 0.0
        %919 = vmatprep.subr.mxu0 0.0
        %920 = vmatpush2.msra.mxu0 0.0
        %921 = vmatprep.subr.mxu0 0.0
        %922 = vmatpush2.msra.mxu0 0.0
        %923 = vmatprep.mubr.f32.mxu0 0.0
        %924 = vmatmul.mubr.f32.gmra.mxu0 %v857
        %v925 = vpop.f32.mrf.mxu0
        %v926 = vadd.f32 0.0, %v925
        %v927 = vpop.f32.mrf.mxu0
        %928 = vdwg.mxu0
        %v929 = vld [vmem:[%s302] sm:$0xff]
        %v930 = vld [vmem:[%s302 + $0x8] sm:$0xff]
        %v931 = vld [vmem:[%s302 + $0x10] sm:$0xff]
        %v932 = vld [vmem:[%s302 + $0x18] sm:$0xff]
        %v933 = vld [vmem:[%s302 + $0x20] sm:$0xff]
        %v934 = vld [vmem:[%s302 + $0x28] sm:$0xff]
        %v935 = vld [vmem:[%s302 + $0x30] sm:$0xff]
        %v936 = vld [vmem:[%s302 + $0x38] sm:$0xff]
        %945 = vrot.lane.b32.xlu0 %v929, 64
        %v946 = vpop.permute.xlu0 %945
        %947 = vrot.lane.b32.xlu0 %v930, 64
        %v948 = vpop.permute.xlu0 %947
        %949 = vrot.lane.b32.xlu0 %v931, 64
        %v950 = vpop.permute.xlu0 %949
        %951 = vrot.lane.b32.xlu0 %v932, 64
        %v952 = vpop.permute.xlu0 %951
        %953 = vrot.lane.b32.xlu0 %v933, 64
        %v954 = vpop.permute.xlu0 %953
        %955 = vrot.lane.b32.xlu0 %v934, 64
        %v956 = vpop.permute.xlu0 %955
        %957 = vrot.lane.b32.xlu0 %v935, 64
        %v958 = vpop.permute.xlu0 %957
        %959 = vrot.lane.b32.xlu0 %v936, 64
        %v960 = vpop.permute.xlu0 %959
        %vm969 = vcmask 523264
        %v970 = vsel %vm969, %v415, %v946
        %v971 = vsel %vm969, %v488, %v948
        %v972 = vsel %vm969, %v561, %v950
        %v973 = vsel %vm969, %v634, %v952
        %v974 = vsel %vm969, %v707, %v954
        %v975 = vsel %vm969, %v780, %v956
        %v976 = vsel %vm969, %v853, %v958
        %v977 = vsel %vm969, %v926, %v960
        %v978 = vld [vmem:[#allocation6] sm:$0xff]
        %v979 = vld [vmem:[#allocation6 + $0x8] sm:$0xff]
        %v980 = vld [vmem:[#allocation6 + $0x10] sm:$0xff]
        %v981 = vld [vmem:[#allocation6 + $0x18] sm:$0xff]
        %v982 = vld [vmem:[#allocation6 + $0x20] sm:$0xff]
        %v983 = vld [vmem:[#allocation6 + $0x28] sm:$0xff]
        %v984 = vld [vmem:[#allocation6 + $0x30] sm:$0xff]
        %v985 = vld [vmem:[#allocation6 + $0x38] sm:$0xff]
        %v986 = vld [vmem:[#allocation6 + $0x40] sm:$0xff]
        %v987 = vld [vmem:[#allocation6 + $0x48] sm:$0xff]
        %v988 = vld [vmem:[#allocation6 + $0x50] sm:$0xff]
        %v989 = vld [vmem:[#allocation6 + $0x58] sm:$0xff]
        %vm990 = vcmask 785408
        %v992 = vsel %vm990, %v970, 0
        %v995 = vsel %vm990, %v971, 0
        %v998 = vsel %vm990, %v972, 0
        %v1001 = vsel %vm990, %v973, 0
        %v1004 = vsel %vm990, %v974, 0
        %v1007 = vsel %vm990, %v975, 0
        %v1010 = vsel %vm990, %v976, 0
        %v1013 = vsel %vm990, %v977, 0
        %1015 = vmatprep.subr.mxu0 0.0
        %1016 = vmatpush1.msra.mxu0 0.0
        %1017 = vmatprep.subr.mxu0 0.0
        %1018 = vmatpush1.msra.mxu0 0.0
        %1019 = vmatprep.subr.mxu0 0.0
        %1020 = vmatpush1.msra.mxu0 0.0
        %1021 = vmatprep.subr.mxu0 0.0
        %1022 = vmatpush1.msra.mxu0 0.0
        %1023 = vmatprep.subr.mxu0 0.0
        %1024 = vmatpush1.msra.mxu0 %v989
        %1025 = vmatprep.subr.mxu0 0.0
        %1026 = vmatpush1.msra.mxu0 %v988
        %1027 = vmatprep.subr.mxu0 0.0
        %1028 = vmatpush1.msra.mxu0 %v987
        %1029 = vmatprep.subr.mxu0 0.0
        %1030 = vmatpush1.msra.mxu0 %v986
        %1031 = vmatprep.subr.mxu0 0.0
        %1032 = vmatpush1.msra.mxu0 %v985
        %1033 = vmatprep.subr.mxu0 0.0
        %1034 = vmatpush1.msra.mxu0 %v984
        %1035 = vmatprep.subr.mxu0 0.0
        %1036 = vmatpush1.msra.mxu0 %v983
        %1037 = vmatprep.subr.mxu0 0.0
        %1038 = vmatpush1.msra.mxu0 %v982
        %1039 = vmatprep.subr.mxu0 0.0
        %1040 = vmatpush1.msra.mxu0 %v981
        %1041 = vmatprep.subr.mxu0 0.0
        %1042 = vmatpush1.msra.mxu0 %v980
        %1043 = vmatprep.subr.mxu0 0.0
        %1044 = vmatpush1.msra.mxu0 %v979
        %1045 = vmatprep.subr.mxu0 0.0
        %1046 = vmatpush1.msra.mxu0 %v978
        %1047 = vmatprep.subr.mxu0 0.0
        %1048 = vmatpush2.msra.mxu0 0.0
        %1049 = vmatprep.subr.mxu0 0.0
        %1050 = vmatpush2.msra.mxu0 0.0
        %1051 = vmatprep.subr.mxu0 0.0
        %1052 = vmatpush2.msra.mxu0 0.0
        %1053 = vmatprep.subr.mxu0 0.0
        %1054 = vmatpush2.msra.mxu0 0.0
        %1055 = vmatprep.subr.mxu0 0.0
        %1056 = vmatpush2.msra.mxu0 0.0
        %1057 = vmatprep.subr.mxu0 0.0
        %1058 = vmatpush2.msra.mxu0 0.0
        %1059 = vmatprep.subr.mxu0 0.0
        %1060 = vmatpush2.msra.mxu0 0.0
        %1061 = vmatprep.subr.mxu0 0.0
        %1062 = vmatpush2.msra.mxu0 0.0
        %1063 = vmatprep.subr.mxu0 0.0
        %1064 = vmatpush2.msra.mxu0 0.0
        %1065 = vmatprep.subr.mxu0 0.0
        %1066 = vmatpush2.msra.mxu0 0.0
        %1067 = vmatprep.subr.mxu0 0.0
        %1068 = vmatpush2.msra.mxu0 0.0
        %1069 = vmatprep.subr.mxu0 0.0
        %1070 = vmatpush2.msra.mxu0 0.0
        %1071 = vmatprep.subr.mxu0 0.0
        %1072 = vmatpush2.msra.mxu0 0.0
        %1073 = vmatprep.subr.mxu0 0.0
        %1074 = vmatpush2.msra.mxu0 0.0
        %1075 = vmatprep.subr.mxu0 0.0
        %1076 = vmatpush2.msra.mxu0 0.0
        %1077 = vmatprep.subr.mxu0 0.0
        %1078 = vmatpush2.msra.mxu0 0.0
        %1079 = vmatprep.mubr.f32.mxu0 0.0
        %1080 = vmatmul.mubr.f32.gmra.mxu0 %v992
        %v1081 = vpop.f32.mrf.mxu0
        %v1082 = vadd.f32 0.0, %v1081
        %v1083 = vpop.f32.mrf.mxu0
        %1084 = vmatprep.mubr.f32.mxu0 0.0
        %1085 = vmatmul.mubr.f32.gmra.mxu0 %v995
        %v1086 = vpop.f32.mrf.mxu0
        %v1087 = vadd.f32 0.0, %v1086
        %v1088 = vpop.f32.mrf.mxu0
        %1089 = vmatprep.mubr.f32.mxu0 0.0
        %1090 = vmatmul.mubr.f32.gmra.mxu0 %v998
        %v1091 = vpop.f32.mrf.mxu0
        %v1092 = vadd.f32 0.0, %v1091
        %v1093 = vpop.f32.mrf.mxu0
        %1094 = vmatprep.mubr.f32.mxu0 0.0
        %1095 = vmatmul.mubr.f32.gmra.mxu0 %v1001
        %v1096 = vpop.f32.mrf.mxu0
        %v1097 = vadd.f32 0.0, %v1096
        %v1098 = vpop.f32.mrf.mxu0
        %1099 = vmatprep.mubr.f32.mxu0 0.0
        %1100 = vmatmul.mubr.f32.gmra.mxu0 %v1004
        %v1101 = vpop.f32.mrf.mxu0
        %v1102 = vadd.f32 0.0, %v1101
        %v1103 = vpop.f32.mrf.mxu0
        %1104 = vmatprep.mubr.f32.mxu0 0.0
        %1105 = vmatmul.mubr.f32.gmra.mxu0 %v1007
        %v1106 = vpop.f32.mrf.mxu0
        %v1107 = vadd.f32 0.0, %v1106
        %v1108 = vpop.f32.mrf.mxu0
        %1109 = vmatprep.mubr.f32.mxu0 0.0
        %1110 = vmatmul.mubr.f32.gmra.mxu0 %v1010
        %v1111 = vpop.f32.mrf.mxu0
        %v1112 = vadd.f32 0.0, %v1111
        %v1113 = vpop.f32.mrf.mxu0
        %1114 = vmatprep.mubr.f32.mxu0 0.0
        %1115 = vmatmul.mubr.f32.gmra.mxu0 %v1013
        %v1116 = vpop.f32.mrf.mxu0
        %v1117 = vadd.f32 0.0, %v1116
        %v1118 = vpop.f32.mrf.mxu0
        %1119 = vdwg.mxu0
        %v1120 = vxor.u32 %v1082, 2147483648
        %v1121 = vxor.u32 %v1087, 2147483648
        %v1122 = vxor.u32 %v1092, 2147483648
        %v1123 = vxor.u32 %v1097, 2147483648
        %v1124 = vxor.u32 %v1102, 2147483648
        %v1125 = vxor.u32 %v1107, 2147483648
        %v1126 = vxor.u32 %v1112, 2147483648
        %v1127 = vxor.u32 %v1117, 2147483648
        %v1128 = vmul.f32 %v1120, 1.442695
        %v1129 = vpow.pop %v1128
        %v1130 = vmul.f32 %v1121, 1.442695
        %v1131 = vpow.pop %v1130
        %v1132 = vmul.f32 %v1122, 1.442695
        %v1133 = vpow.pop %v1132
        %v1134 = vmul.f32 %v1123, 1.442695
        %v1135 = vpow.pop %v1134
        %v1136 = vmul.f32 %v1124, 1.442695
        %v1137 = vpow.pop %v1136
        %v1138 = vmul.f32 %v1125, 1.442695
        %v1139 = vpow.pop %v1138
        %v1140 = vmul.f32 %v1126, 1.442695
        %v1141 = vpow.pop %v1140
        %v1142 = vmul.f32 %v1127, 1.442695
        %v1143 = vpow.pop %v1142
        %v1144 = vadd.f32 %v1129, 1.0
        %v1145 = vadd.f32 %v1131, 1.0
        %v1146 = vadd.f32 %v1133, 1.0
        %v1147 = vadd.f32 %v1135, 1.0
        %v1148 = vadd.f32 %v1137, 1.0
        %v1149 = vadd.f32 %v1139, 1.0
        %v1150 = vadd.f32 %v1141, 1.0
        %v1151 = vadd.f32 %v1143, 1.0
        %v1152 = vrcp.pop %v1144
        %v1153 = vmul.f32 1.0, %v1152
        %v1154 = vrcp.pop %v1145
        %v1155 = vmul.f32 1.0, %v1154
        %v1156 = vrcp.pop %v1146
        %v1157 = vmul.f32 1.0, %v1156
        %v1158 = vrcp.pop %v1147
        %v1159 = vmul.f32 1.0, %v1158
        %v1160 = vrcp.pop %v1148
        %v1161 = vmul.f32 1.0, %v1160
        %v1162 = vrcp.pop %v1149
        %v1163 = vmul.f32 1.0, %v1162
        %v1164 = vrcp.pop %v1150
        %v1165 = vmul.f32 1.0, %v1164
        %v1166 = vrcp.pop %v1151
        %v1167 = vmul.f32 1.0, %v1166
        %v1168 = vsub.f32 %v1153, 1.0
        %v1169 = vsub.f32 %v1155, 1.0
        %v1170 = vsub.f32 %v1157, 1.0
        %v1171 = vsub.f32 %v1159, 1.0
        %v1172 = vsub.f32 %v1161, 1.0
        %v1173 = vsub.f32 %v1163, 1.0
        %v1174 = vsub.f32 %v1165, 1.0
        %v1175 = vsub.f32 %v1167, 1.0
        %v1176 = vmul.f32 %v1168, %v929
        %v1177 = vmul.f32 %v1169, %v930
        %v1178 = vmul.f32 %v1170, %v931
        %v1179 = vmul.f32 %v1171, %v932
        %v1180 = vmul.f32 %v1172, %v933
        %v1181 = vmul.f32 %v1173, %v934
        %v1182 = vmul.f32 %v1174, %v935
        %v1183 = vmul.f32 %v1175, %v936
        %v1184 = vld [vmem:[%s4] sm:$0xff]
        %v1185 = vld [vmem:[%s4 + $0x8] sm:$0xff]
        %v1186 = vld [vmem:[%s4 + $0x10] sm:$0xff]
        %v1187 = vld [vmem:[%s4 + $0x18] sm:$0xff]
        %v1189 = vsel %vm344, %v1176, 0
        %v1192 = vsel %vm344, %v1177, 0
        %v1195 = vsel %vm344, %v1178, 0
        %v1198 = vsel %vm344, %v1179, 0
        %v1201 = vsel %vm344, %v1180, 0
        %v1204 = vsel %vm344, %v1181, 0
        %v1207 = vsel %vm344, %v1182, 0
        %v1210 = vsel %vm344, %v1183, 0
        %1212 = vmatprep.subr.mxu0 0.0
        %1213 = vmatpush1.msra.mxu0 0.0
        %1214 = vmatprep.subr.mxu0 0.0
        %1215 = vmatpush1.msra.mxu0 0.0
        %1216 = vmatprep.subr.mxu0 0.0
        %1217 = vmatpush1.msra.mxu0 0.0
        %1218 = vmatprep.subr.mxu0 0.0
        %1219 = vmatpush1.msra.mxu0 0.0
        %1220 = vmatprep.subr.mxu0 0.0
        %1221 = vmatpush1.msra.mxu0 0.0
        %1222 = vmatprep.subr.mxu0 0.0
        %1223 = vmatpush1.msra.mxu0 0.0
        %1224 = vmatprep.subr.mxu0 0.0
        %1225 = vmatpush1.msra.mxu0 0.0
        %1226 = vmatprep.subr.mxu0 0.0
        %1227 = vmatpush1.msra.mxu0 0.0
        %1228 = vmatprep.subr.mxu0 0.0
        %1229 = vmatpush1.msra.mxu0 0.0
        %1230 = vmatprep.subr.mxu0 0.0
        %1231 = vmatpush1.msra.mxu0 0.0
        %1232 = vmatprep.subr.mxu0 0.0
        %1233 = vmatpush1.msra.mxu0 0.0
        %1234 = vmatprep.subr.mxu0 0.0
        %1235 = vmatpush1.msra.mxu0 0.0
        %1236 = vmatprep.subr.mxu0 0.0
        %1237 = vmatpush1.msra.mxu0 %v1187
        %1238 = vmatprep.subr.mxu0 0.0
        %1239 = vmatpush1.msra.mxu0 %v1186
        %1240 = vmatprep.subr.mxu0 0.0
        %1241 = vmatpush1.msra.mxu0 %v1185
        %1242 = vmatprep.subr.mxu0 0.0
        %1243 = vmatpush1.msra.mxu0 %v1184
        %1244 = vmatprep.subr.mxu0 0.0
        %1245 = vmatpush2.msra.mxu0 0.0
        %1246 = vmatprep.subr.mxu0 0.0
        %1247 = vmatpush2.msra.mxu0 0.0
        %1248 = vmatprep.subr.mxu0 0.0
        %1249 = vmatpush2.msra.mxu0 0.0
        %1250 = vmatprep.subr.mxu0 0.0
        %1251 = vmatpush2.msra.mxu0 0.0
        %1252 = vmatprep.subr.mxu0 0.0
        %1253 = vmatpush2.msra.mxu0 0.0
        %1254 = vmatprep.subr.mxu0 0.0
        %1255 = vmatpush2.msra.mxu0 0.0
        %1256 = vmatprep.subr.mxu0 0.0
        %1257 = vmatpush2.msra.mxu0 0.0
        %1258 = vmatprep.subr.mxu0 0.0
        %1259 = vmatpush2.msra.mxu0 0.0
        %1260 = vmatprep.subr.mxu0 0.0
        %1261 = vmatpush2.msra.mxu0 0.0
        %1262 = vmatprep.subr.mxu0 0.0
        %1263 = vmatpush2.msra.mxu0 0.0
        %1264 = vmatprep.subr.mxu0 0.0
        %1265 = vmatpush2.msra.mxu0 0.0
        %1266 = vmatprep.subr.mxu0 0.0
        %1267 = vmatpush2.msra.mxu0 0.0
        %1268 = vmatprep.subr.mxu0 0.0
        %1269 = vmatpush2.msra.mxu0 0.0
        %1270 = vmatprep.subr.mxu0 0.0
        %1271 = vmatpush2.msra.mxu0 0.0
        %1272 = vmatprep.subr.mxu0 0.0
        %1273 = vmatpush2.msra.mxu0 0.0
        %1274 = vmatprep.subr.mxu0 0.0
        %1275 = vmatpush2.msra.mxu0 0.0
        %1276 = vmatprep.mubr.f32.mxu0 0.0
        %1277 = vmatmul.mubr.f32.gmra.mxu0 %v1189
        %v1278 = vpop.f32.mrf.mxu0
        %v1279 = vadd.f32 0.0, %v1278
        %v1280 = vpop.f32.mrf.mxu0
        %1281 = vmatprep.mubr.f32.mxu0 0.0
        %1282 = vmatmul.mubr.f32.gmra.mxu0 %v1192
        %v1283 = vpop.f32.mrf.mxu0
        %v1284 = vadd.f32 0.0, %v1283
        %v1285 = vpop.f32.mrf.mxu0
        %1286 = vmatprep.mubr.f32.mxu0 0.0
        %1287 = vmatmul.mubr.f32.gmra.mxu0 %v1195
        %v1288 = vpop.f32.mrf.mxu0
        %v1289 = vadd.f32 0.0, %v1288
        %v1290 = vpop.f32.mrf.mxu0
        %1291 = vmatprep.mubr.f32.mxu0 0.0
        %1292 = vmatmul.mubr.f32.gmra.mxu0 %v1198
        %v1293 = vpop.f32.mrf.mxu0
        %v1294 = vadd.f32 0.0, %v1293
        %v1295 = vpop.f32.mrf.mxu0
        %1296 = vmatprep.mubr.f32.mxu0 0.0
        %1297 = vmatmul.mubr.f32.gmra.mxu0 %v1201
        %v1298 = vpop.f32.mrf.mxu0
        %v1299 = vadd.f32 0.0, %v1298
        %v1300 = vpop.f32.mrf.mxu0
        %1301 = vmatprep.mubr.f32.mxu0 0.0
        %1302 = vmatmul.mubr.f32.gmra.mxu0 %v1204
        %v1303 = vpop.f32.mrf.mxu0
        %v1304 = vadd.f32 0.0, %v1303
        %v1305 = vpop.f32.mrf.mxu0
        %1306 = vmatprep.mubr.f32.mxu0 0.0
        %1307 = vmatmul.mubr.f32.gmra.mxu0 %v1207
        %v1308 = vpop.f32.mrf.mxu0
        %v1309 = vadd.f32 0.0, %v1308
        %v1310 = vpop.f32.mrf.mxu0
        %1311 = vmatprep.mubr.f32.mxu0 0.0
        %1312 = vmatmul.mubr.f32.gmra.mxu0 %v1210
        %v1313 = vpop.f32.mrf.mxu0
        %v1314 = vadd.f32 0.0, %v1313
        %v1315 = vpop.f32.mrf.mxu0
        %1316 = vdwg.mxu0
        %1325 = vrot.lane.b32.xlu0 %v1279, 64
        %v1326 = vpop.permute.xlu0 %1325
        %1327 = vrot.lane.b32.xlu0 %v1284, 64
        %v1328 = vpop.permute.xlu0 %1327
        %1329 = vrot.lane.b32.xlu0 %v1289, 64
        %v1330 = vpop.permute.xlu0 %1329
        %1331 = vrot.lane.b32.xlu0 %v1294, 64
        %v1332 = vpop.permute.xlu0 %1331
        %1333 = vrot.lane.b32.xlu0 %v1299, 64
        %v1334 = vpop.permute.xlu0 %1333
        %1335 = vrot.lane.b32.xlu0 %v1304, 64
        %v1336 = vpop.permute.xlu0 %1335
        %1337 = vrot.lane.b32.xlu0 %v1309, 64
        %v1338 = vpop.permute.xlu0 %1337
        %1339 = vrot.lane.b32.xlu0 %v1314, 64
        %v1340 = vpop.permute.xlu0 %1339
        %v1349 = vadd.f32 %v1082, %v1326
        %v1350 = vadd.f32 %v1087, %v1328
        %v1351 = vadd.f32 %v1092, %v1330
        %v1352 = vadd.f32 %v1097, %v1332
        %v1353 = vadd.f32 %v1102, %v1334
        %v1354 = vadd.f32 %v1107, %v1336
        %v1355 = vadd.f32 %v1112, %v1338
        %v1356 = vadd.f32 %v1117, %v1340
        %v1357 = vtanh.pop %v1349
        %v1358 = vtanh.pop %v1350
        %v1359 = vtanh.pop %v1351
        %v1360 = vtanh.pop %v1352
        %v1361 = vtanh.pop %v1353
        %v1362 = vtanh.pop %v1354
        %v1363 = vtanh.pop %v1355
        %v1364 = vtanh.pop %v1356
        %v1365 = vsub.f32 1.0, %v1153
        %v1366 = vsub.f32 1.0, %v1155
        %v1367 = vsub.f32 1.0, %v1157
        %v1368 = vsub.f32 1.0, %v1159
        %v1369 = vsub.f32 1.0, %v1161
        %v1370 = vsub.f32 1.0, %v1163
        %v1371 = vsub.f32 1.0, %v1165
        %v1372 = vsub.f32 1.0, %v1167
        %1373 = vrot.lane.b32.xlu0 %v929, 32
        %v1374 = vpop.permute.xlu0 %1373
        %1375 = vrot.lane.b32.xlu0 %v930, 32
        %v1376 = vpop.permute.xlu0 %1375
        %1377 = vrot.lane.b32.xlu0 %v931, 32
        %v1378 = vpop.permute.xlu0 %1377
        %1379 = vrot.lane.b32.xlu0 %v932, 32
        %v1380 = vpop.permute.xlu0 %1379
        %1381 = vrot.lane.b32.xlu0 %v933, 32
        %v1382 = vpop.permute.xlu0 %1381
        %1383 = vrot.lane.b32.xlu0 %v934, 32
        %v1384 = vpop.permute.xlu0 %1383
        %1385 = vrot.lane.b32.xlu0 %v935, 32
        %v1386 = vpop.permute.xlu0 %1385
        %1387 = vrot.lane.b32.xlu0 %v936, 32
        %v1388 = vpop.permute.xlu0 %1387
        %v1397 = vmul.f32 %v1365, %v1374
        %v1398 = vmul.f32 %v1366, %v1376
        %v1399 = vmul.f32 %v1367, %v1378
        %v1400 = vmul.f32 %v1368, %v1380
        %v1401 = vmul.f32 %v1369, %v1382
        %v1402 = vmul.f32 %v1370, %v1384
        %v1403 = vmul.f32 %v1371, %v1386
        %v1404 = vmul.f32 %v1372, %v1388
        %1413 = vrot.lane.b32.xlu0 %v1357, 96
        %v1414 = vpop.permute.xlu0 %1413
        %1415 = vrot.lane.b32.xlu0 %v1358, 96
        %v1416 = vpop.permute.xlu0 %1415
        %1417 = vrot.lane.b32.xlu0 %v1359, 96
        %v1418 = vpop.permute.xlu0 %1417
        %1419 = vrot.lane.b32.xlu0 %v1360, 96
        %v1420 = vpop.permute.xlu0 %1419
        %1421 = vrot.lane.b32.xlu0 %v1361, 96
        %v1422 = vpop.permute.xlu0 %1421
        %1423 = vrot.lane.b32.xlu0 %v1362, 96
        %v1424 = vpop.permute.xlu0 %1423
        %1425 = vrot.lane.b32.xlu0 %v1363, 96
        %v1426 = vpop.permute.xlu0 %1425
        %1427 = vrot.lane.b32.xlu0 %v1364, 96
        %v1428 = vpop.permute.xlu0 %1427
        %v1437 = vmul.f32 %v1153, %v1414
        %v1438 = vmul.f32 %v1155, %v1416
        %v1439 = vmul.f32 %v1157, %v1418
        %v1440 = vmul.f32 %v1159, %v1420
        %v1441 = vmul.f32 %v1161, %v1422
        %v1442 = vmul.f32 %v1163, %v1424
        %v1443 = vmul.f32 %v1165, %v1426
        %v1444 = vmul.f32 %v1167, %v1428
        %v1445 = vadd.f32 %v1397, %v1437
        %v1446 = vadd.f32 %v1398, %v1438
        %v1447 = vadd.f32 %v1399, %v1439
        %v1448 = vadd.f32 %v1400, %v1440
        %v1449 = vadd.f32 %v1401, %v1441
        %v1450 = vadd.f32 %v1402, %v1442
        %v1451 = vadd.f32 %v1403, %v1443
        %v1452 = vadd.f32 %v1404, %v1444
        %1461 = vrot.lane.b32.xlu0 %v1445, 96
        %v1462 = vpop.permute.xlu0 %1461
        %1463 = vrot.lane.b32.xlu0 %v1446, 96
        %v1464 = vpop.permute.xlu0 %1463
        %1465 = vrot.lane.b32.xlu0 %v1447, 96
        %v1466 = vpop.permute.xlu0 %1465
        %1467 = vrot.lane.b32.xlu0 %v1448, 96
        %v1468 = vpop.permute.xlu0 %1467
        %1469 = vrot.lane.b32.xlu0 %v1449, 96
        %v1470 = vpop.permute.xlu0 %1469
        %1471 = vrot.lane.b32.xlu0 %v1450, 96
        %v1472 = vpop.permute.xlu0 %1471
        %1473 = vrot.lane.b32.xlu0 %v1451, 96
        %v1474 = vpop.permute.xlu0 %1473
        %1475 = vrot.lane.b32.xlu0 %v1452, 96
        %v1476 = vpop.permute.xlu0 %1475
        %1485 = vst.msk [vmem:[#allocation2] sm:$0xff] %vm344, %v1462
        %1486 = vst.msk [vmem:[#allocation2 + $0x8] sm:$0xff] %vm344, %v1464
        %1487 = vst.msk [vmem:[#allocation2 + $0x10] sm:$0xff] %vm344, %v1466
        %1488 = vst.msk [vmem:[#allocation2 + $0x18] sm:$0xff] %vm344, %v1468
        %1489 = vst.msk [vmem:[#allocation2 + $0x20] sm:$0xff] %vm344, %v1470
        %1490 = vst.msk [vmem:[#allocation2 + $0x28] sm:$0xff] %vm344, %v1472
        %1491 = vst.msk [vmem:[#allocation2 + $0x30] sm:$0xff] %vm344, %v1474
        %1492 = vst.msk [vmem:[#allocation2 + $0x38] sm:$0xff] %vm344, %v1476
        %v1493 = vld [vmem:[#allocation2] sm:$0x1]
        %v1494 = vld [vmem:[#allocation2 + $0x8] sm:$0x1]
        %v1495 = vld [vmem:[#allocation2 + $0x10] sm:$0x1]
        %v1496 = vld [vmem:[#allocation2 + $0x18] sm:$0x1]
        %v1497 = vld [vmem:[#allocation2 + $0x20] sm:$0x1]
        %v1498 = vld [vmem:[#allocation2 + $0x28] sm:$0x1]
        %v1499 = vld [vmem:[#allocation2 + $0x30] sm:$0x1]
        %v1500 = vld [vmem:[#allocation2 + $0x38] sm:$0x1]
        %v1501 = vld [vmem:[#allocation2 + $0x1] sm:$0x1]
        %v1502 = vld [vmem:[#allocation2 + $0x9] sm:$0x1]
        %v1503 = vld [vmem:[#allocation2 + $0x11] sm:$0x1]
        %v1504 = vld [vmem:[#allocation2 + $0x19] sm:$0x1]
        %v1505 = vld [vmem:[#allocation2 + $0x21] sm:$0x1]
        %v1506 = vld [vmem:[#allocation2 + $0x29] sm:$0x1]
        %v1507 = vld [vmem:[#allocation2 + $0x31] sm:$0x1]
        %v1508 = vld [vmem:[#allocation2 + $0x39] sm:$0x1]
        %v1509 = vld [vmem:[#allocation2 + $0x2] sm:$0x1]
        %v1510 = vld [vmem:[#allocation2 + $0xa] sm:$0x1]
        %v1511 = vld [vmem:[#allocation2 + $0x12] sm:$0x1]
        %v1512 = vld [vmem:[#allocation2 + $0x1a] sm:$0x1]
        %v1513 = vld [vmem:[#allocation2 + $0x22] sm:$0x1]
        %v1514 = vld [vmem:[#allocation2 + $0x2a] sm:$0x1]
        %v1515 = vld [vmem:[#allocation2 + $0x32] sm:$0x1]
        %v1516 = vld [vmem:[#allocation2 + $0x3a] sm:$0x1]
        %v1517 = vld [vmem:[#allocation2 + $0x3] sm:$0x1]
        %v1518 = vld [vmem:[#allocation2 + $0xb] sm:$0x1]
        %v1519 = vld [vmem:[#allocation2 + $0x13] sm:$0x1]
        %v1520 = vld [vmem:[#allocation2 + $0x1b] sm:$0x1]
        %v1521 = vld [vmem:[#allocation2 + $0x23] sm:$0x1]
        %v1522 = vld [vmem:[#allocation2 + $0x2b] sm:$0x1]
        %v1523 = vld [vmem:[#allocation2 + $0x33] sm:$0x1]
        %v1524 = vld [vmem:[#allocation2 + $0x3b] sm:$0x1]
        %v1525 = vld [vmem:[#allocation2 + $0x4] sm:$0x1]
        %v1526 = vld [vmem:[#allocation2 + $0xc] sm:$0x1]
        %v1527 = vld [vmem:[#allocation2 + $0x14] sm:$0x1]
        %v1528 = vld [vmem:[#allocation2 + $0x1c] sm:$0x1]
        %v1529 = vld [vmem:[#allocation2 + $0x24] sm:$0x1]
        %v1530 = vld [vmem:[#allocation2 + $0x2c] sm:$0x1]
        %v1531 = vld [vmem:[#allocation2 + $0x34] sm:$0x1]
        %v1532 = vld [vmem:[#allocation2 + $0x3c] sm:$0x1]
        %v1533 = vld [vmem:[#allocation2 + $0x5] sm:$0x1]
        %v1534 = vld [vmem:[#allocation2 + $0xd] sm:$0x1]
        %v1535 = vld [vmem:[#allocation2 + $0x15] sm:$0x1]
        %v1536 = vld [vmem:[#allocation2 + $0x1d] sm:$0x1]
        %v1537 = vld [vmem:[#allocation2 + $0x25] sm:$0x1]
        %v1538 = vld [vmem:[#allocation2 + $0x2d] sm:$0x1]
        %v1539 = vld [vmem:[#allocation2 + $0x35] sm:$0x1]
        %v1540 = vld [vmem:[#allocation2 + $0x3d] sm:$0x1]
        %v1541 = vld [vmem:[#allocation2 + $0x6] sm:$0x1]
        %v1542 = vld [vmem:[#allocation2 + $0xe] sm:$0x1]
        %v1543 = vld [vmem:[#allocation2 + $0x16] sm:$0x1]
        %v1544 = vld [vmem:[#allocation2 + $0x1e] sm:$0x1]
        %v1545 = vld [vmem:[#allocation2 + $0x26] sm:$0x1]
        %v1546 = vld [vmem:[#allocation2 + $0x2e] sm:$0x1]
        %v1547 = vld [vmem:[#allocation2 + $0x36] sm:$0x1]
        %v1548 = vld [vmem:[#allocation2 + $0x3e] sm:$0x1]
        %v1549 = vld [vmem:[#allocation2 + $0x7] sm:$0x1]
        %v1550 = vld [vmem:[#allocation2 + $0xf] sm:$0x1]
        %v1551 = vld [vmem:[#allocation2 + $0x17] sm:$0x1]
        %v1552 = vld [vmem:[#allocation2 + $0x1f] sm:$0x1]
        %v1553 = vld [vmem:[#allocation2 + $0x27] sm:$0x1]
        %v1554 = vld [vmem:[#allocation2 + $0x2f] sm:$0x1]
        %v1555 = vld [vmem:[#allocation2 + $0x37] sm:$0x1]
        %v1556 = vld [vmem:[#allocation2 + $0x3f] sm:$0x1]
        %v1565 = vrot.slane %v1494, 7
        %vm1566 = vcmask 1041409
        %v1567 = vsel %vm1566, %v1565, %v1493
        %v1568 = vrot.slane %v1495, 6
        %vm1569 = vcmask 1042434
        %v1570 = vsel %vm1569, %v1568, %v1567
        %v1571 = vrot.slane %v1496, 5
        %vm1572 = vcmask 1043459
        %v1573 = vsel %vm1572, %v1571, %v1570
        %v1574 = vrot.slane %v1497, 4
        %vm1575 = vcmask 1044484
        %v1576 = vsel %vm1575, %v1574, %v1573
        %v1577 = vrot.slane %v1498, 3
        %vm1578 = vcmask 1045509
        %v1579 = vsel %vm1578, %v1577, %v1576
        %v1580 = vrot.slane %v1499, 2
        %vm1581 = vcmask 1046534
        %v1582 = vsel %vm1581, %v1580, %v1579
        %v1583 = vrot.slane %v1500, 1
        %vm1584 = vcmask 1047559
        %v1585 = vsel %vm1584, %v1583, %v1582
        %v1595 = vrot.slane %v1502, 7
        %v1596 = vsel %vm1566, %v1595, %v1501
        %v1597 = vrot.slane %v1503, 6
        %v1598 = vsel %vm1569, %v1597, %v1596
        %v1599 = vrot.slane %v1504, 5
        %v1600 = vsel %vm1572, %v1599, %v1598
        %v1601 = vrot.slane %v1505, 4
        %v1602 = vsel %vm1575, %v1601, %v1600
        %v1603 = vrot.slane %v1506, 3
        %v1604 = vsel %vm1578, %v1603, %v1602
        %v1605 = vrot.slane %v1507, 2
        %v1606 = vsel %vm1581, %v1605, %v1604
        %v1607 = vrot.slane %v1508, 1
        %v1608 = vsel %vm1584, %v1607, %v1606
        %1609 = vrot.lane.b32.xlu0 %v1608, 32
        %v1610 = vpop.permute.xlu0 %1609
        %v1620 = vrot.slane %v1510, 7
        %v1621 = vsel %vm1566, %v1620, %v1509
        %v1622 = vrot.slane %v1511, 6
        %v1623 = vsel %vm1569, %v1622, %v1621
        %v1624 = vrot.slane %v1512, 5
        %v1625 = vsel %vm1572, %v1624, %v1623
        %v1626 = vrot.slane %v1513, 4
        %v1627 = vsel %vm1575, %v1626, %v1625
        %v1628 = vrot.slane %v1514, 3
        %v1629 = vsel %vm1578, %v1628, %v1627
        %v1630 = vrot.slane %v1515, 2
        %v1631 = vsel %vm1581, %v1630, %v1629
        %v1632 = vrot.slane %v1516, 1
        %v1633 = vsel %vm1584, %v1632, %v1631
        %1634 = vrot.lane.b32.xlu0 %v1633, 64
        %v1635 = vpop.permute.xlu0 %1634
        %v1645 = vrot.slane %v1518, 7
        %v1646 = vsel %vm1566, %v1645, %v1517
        %v1647 = vrot.slane %v1519, 6
        %v1648 = vsel %vm1569, %v1647, %v1646
        %v1649 = vrot.slane %v1520, 5
        %v1650 = vsel %vm1572, %v1649, %v1648
        %v1651 = vrot.slane %v1521, 4
        %v1652 = vsel %vm1575, %v1651, %v1650
        %v1653 = vrot.slane %v1522, 3
        %v1654 = vsel %vm1578, %v1653, %v1652
        %v1655 = vrot.slane %v1523, 2
        %v1656 = vsel %vm1581, %v1655, %v1654
        %v1657 = vrot.slane %v1524, 1
        %v1658 = vsel %vm1584, %v1657, %v1656
        %1659 = vrot.lane.b32.xlu0 %v1658, 96
        %v1660 = vpop.permute.xlu0 %1659
        %v1670 = vrot.slane %v1526, 7
        %v1671 = vsel %vm1566, %v1670, %v1525
        %v1672 = vrot.slane %v1527, 6
        %v1673 = vsel %vm1569, %v1672, %v1671
        %v1674 = vrot.slane %v1528, 5
        %v1675 = vsel %vm1572, %v1674, %v1673
        %v1676 = vrot.slane %v1529, 4
        %v1677 = vsel %vm1575, %v1676, %v1675
        %v1678 = vrot.slane %v1530, 3
        %v1679 = vsel %vm1578, %v1678, %v1677
        %v1680 = vrot.slane %v1531, 2
        %v1681 = vsel %vm1581, %v1680, %v1679
        %v1682 = vrot.slane %v1532, 1
        %v1683 = vsel %vm1584, %v1682, %v1681
        %v1693 = vrot.slane %v1534, 7
        %v1694 = vsel %vm1566, %v1693, %v1533
        %v1695 = vrot.slane %v1535, 6
        %v1696 = vsel %vm1569, %v1695, %v1694
        %v1697 = vrot.slane %v1536, 5
        %v1698 = vsel %vm1572, %v1697, %v1696
        %v1699 = vrot.slane %v1537, 4
        %v1700 = vsel %vm1575, %v1699, %v1698
        %v1701 = vrot.slane %v1538, 3
        %v1702 = vsel %vm1578, %v1701, %v1700
        %v1703 = vrot.slane %v1539, 2
        %v1704 = vsel %vm1581, %v1703, %v1702
        %v1705 = vrot.slane %v1540, 1
        %v1706 = vsel %vm1584, %v1705, %v1704
        %1707 = vrot.lane.b32.xlu0 %v1706, 32
        %v1708 = vpop.permute.xlu0 %1707
        %v1718 = vrot.slane %v1542, 7
        %v1719 = vsel %vm1566, %v1718, %v1541
        %v1720 = vrot.slane %v1543, 6
        %v1721 = vsel %vm1569, %v1720, %v1719
        %v1722 = vrot.slane %v1544, 5
        %v1723 = vsel %vm1572, %v1722, %v1721
        %v1724 = vrot.slane %v1545, 4
        %v1725 = vsel %vm1575, %v1724, %v1723
        %v1726 = vrot.slane %v1546, 3
        %v1727 = vsel %vm1578, %v1726, %v1725
        %v1728 = vrot.slane %v1547, 2
        %v1729 = vsel %vm1581, %v1728, %v1727
        %v1730 = vrot.slane %v1548, 1
        %v1731 = vsel %vm1584, %v1730, %v1729
        %1732 = vrot.lane.b32.xlu0 %v1731, 64
        %v1733 = vpop.permute.xlu0 %1732
        %v1743 = vrot.slane %v1550, 7
        %v1744 = vsel %vm1566, %v1743, %v1549
        %v1745 = vrot.slane %v1551, 6
        %v1746 = vsel %vm1569, %v1745, %v1744
        %v1747 = vrot.slane %v1552, 5
        %v1748 = vsel %vm1572, %v1747, %v1746
        %v1749 = vrot.slane %v1553, 4
        %v1750 = vsel %vm1575, %v1749, %v1748
        %v1751 = vrot.slane %v1554, 3
        %v1752 = vsel %vm1578, %v1751, %v1750
        %v1753 = vrot.slane %v1555, 2
        %v1754 = vsel %vm1581, %v1753, %v1752
        %v1755 = vrot.slane %v1556, 1
        %v1756 = vsel %vm1584, %v1755, %v1754
        %1757 = vrot.lane.b32.xlu0 %v1756, 96
        %v1758 = vpop.permute.xlu0 %1757
        %v1760 = vsel %vm344, %v1585, %v1610
        %v1761 = vsel %vm969, %v1760, %v1635
        %v1762 = vsel %vm990, %v1761, %v1660
        %v1763 = vsel %vm344, %v1683, %v1708
        %v1764 = vsel %vm969, %v1763, %v1733
        %v1765 = vsel %vm990, %v1764, %v1758
        %1766 = vst [vmem:[%s290] sm:$0xff] %v1762
        %1767 = vst [vmem:[%s290 + $0x8] sm:$0xff] %v1765
        %s1768 = sand.u32 %s151, 1
        %s1769 = scalar_lea.sflag [#allocation5], %s1768
        %s1770 = sand.u32 %s151, 1
        %s1771 = smul.addr %s1770, 16
        %s1772 = scalar_lea.vmem [#allocation8], %s1771
        // Predicated region
        $region49: #{tpu_custom_call.1} parent=39 // pred_check
          %p1773 = pneg %p161
        $region50: #{tpu_custom_call.1} parent=39 // pred_check_branch
          %1775 = sbr.rel (%p1773) target = $region52
        $region51: #{tpu_custom_call.1} parent=39 // pred_region
          %s1777 = ssub.s32 256, 256
          %1778 = vsyncadd %s1769, %s1777
          %s1779 = smul.addr %s23, 2
          %s1780 = smul.addr %s1779, 128
          %s1781 = scalar_lea.hbm %s5, %s1780
          %s1783 = sshll.u32 %s1772, 4
          %s1784 = int_to_ptr.vmem [resolvable:$true] %s1783
          %1786 = dma.vmem_to_hbm [thread:$0]  %s1784, 256, %s1781, %s1769
        $region52: #{tpu_custom_call.1} parent=39 // pred_fallthru
          _
      $region40: #{tpu_custom_call.1} parent=5 // pred_fallthru
        _
      %p1787 = scmp.le.s32.totalorder 2, %s18
      // Predicated region
      $region53: #{tpu_custom_call.1} parent=5 // pred_check
        %p1788 = pneg %p1787
      $region54: #{tpu_custom_call.1} parent=5 // pred_check_branch
        %1790 = sbr.rel (%p1788) target = $region56
      $region55: #{tpu_custom_call.1} parent=5 // pred_region
        %s1791 = ssub.s32 %s18, 2
        // Predicated region
        $region57: #{tpu_custom_call.1} parent=55 // pred_check
          %p1792 = pneg %p167
        $region58: #{tpu_custom_call.1} parent=55 // pred_check_branch
          %1794 = sbr.rel (%p1792) target = $region60
        $region59: #{tpu_custom_call.1} parent=55 // pred_region
          %s1795 = sand.u32 %s152, 1
          %s1796 = scalar_lea.sflag [#allocation5], %s1795
          %s1797 = sand.u32 %s152, 1
          %s1798 = smul.addr %s1797, 16
          %s1799 = scalar_lea.vmem [#allocation8], %s1798
          %1800 = dma.done %s1796, 256
        $region60: #{tpu_custom_call.1} parent=55 // pred_fallthru
          _
      $region56: #{tpu_custom_call.1} parent=5 // pred_fallthru
        _
    $region6: #{tpu_custom_call.1} parent=1 // loop_footer
      %s22 = sadd.s32 1, %s18
    $region7: #{tpu_custom_call.1} parent=1 // loop_footer_branch
      %17 = sbr.rel target = $region3
    $region8: #{tpu_custom_call.1} parent=1 // loop_exit
      _
    %1801 = vsyncpa [#allocation4], 1
    %s1802 = scalar_lea.sflag [#allocation4], 1
    %1803 = vsyncpa %s1802, 1
    %1804 = vsyncpa [#allocation7], 1
    %1805 = vsyncpa [#allocation5], 1
    %s1806 = scalar_lea.sflag [#allocation5], 1
    %1807 = vsyncpa %s1806, 1

</llo_original>
